<compile_context>
chip_gen: v6e
topology: v6e:2x2x1
jax: 0.10.0
libtpu: 0.0.40
codegen_flags: <defaults>
</compile_context>

<pallas_src>
import functools
import math

import jax
import jax.numpy as jnp
from jax.experimental import pallas as pl
from jax.experimental.pallas import tpu as pltpu

# Full-f32 dots everywhere (reference and in-kernel) so the numerics match.
jax.config.update("jax_default_matmul_precision", "highest")


# ---------------------------------------------------------------------------
# Kernel body: fused MLP. Refs: x, (w0, b0), ..., (wn, bn), out.
# Works identically on unpacked (D=32) and 4-way packed (D=128) data because
# packing is purely a host-side layout transform (block-diag weights).
# ---------------------------------------------------------------------------
def _make_mlp_kernel(num_layers: int, residual_flags: tuple, rowvec_last: bool):
    def kernel(*refs):
        x_ref = refs[0]
        o_ref = refs[-1]
        wb = refs[1:-1]

        h = x_ref[...].astype(jnp.float32)
        for i in range(num_layers):
            w = wb[2 * i][...]
            b = wb[2 * i + 1][...]            # [1, Dout] -> broadcasts over rows
            last = i == num_layers - 1

            if last and rowvec_last:
                # 1-wide output (unpacked fallback): VPU multiply + lane reduce,
                # skip a 1-column MXU matmul.
                y = jnp.sum(h * w, axis=-1, keepdims=True) + b
            else:
                y = jnp.dot(h, w, preferred_element_type=jnp.float32) + b

            if residual_flags[i]:             # residual before activation
                y = y + h
            if not last:
                y = jnp.maximum(y, 0.0)       # relu
            h = y

        o_ref[...] = h.astype(o_ref.dtype)

    return kernel


# ---------------------------------------------------------------------------
# Parameter init (xavier_uniform weights, zero biases -- matches module init).
# Hidden weights stored pre-transposed [Din, Dout]; final Linear(.,1) stored as
# a PyTorch-layout row vector [1, Din] so the unpacked path can lane-reduce.
# ---------------------------------------------------------------------------
def xavier_uniform(key, shape, fan_in, fan_out, dtype=jnp.float32):
    bound = math.sqrt(6.0 / (fan_in + fan_out))
    return jax.random.uniform(key, shape, dtype=dtype, minval=-bound, maxval=bound)


def init_params(key, input_dim, layer_dims):
    dims = [input_dim] + list(layer_dims) + [1]
    n = len(dims) - 1
    params = []
    for i in range(n):
        fan_in, fan_out = dims[i], dims[i + 1]
        key, sub = jax.random.split(key)
        if i == n - 1 and fan_out == 1:
            w = xavier_uniform(sub, (1, fan_in), fan_in, fan_out)      # row vector
        else:
            w = xavier_uniform(sub, (fan_in, fan_out), fan_in, fan_out)  # [Din, Dout]
        b = jnp.zeros((1, fan_out), dtype=jnp.float32)
        params.append((w, b))
    return params


def _pack_params(params, pack):
    """Host-side block-diagonal replication so `pack` logical rows share one
    128-lane vreg row: W -> kron(I_pack, W), b -> tile(b, pack)."""
    packed = []
    n = len(params)
    eye = jnp.eye(pack, dtype=jnp.float32)
    for i, (w, b) in enumerate(params):
        dout = b.shape[1]
        if i == n - 1 and dout == 1 and w.shape[0] == 1:
            w_col = w.T                      # [Din, 1] (host-side transpose, free)
        else:
            w_col = w                        # [Din, Dout]
        wp = jnp.kron(eye, w_col)            # [pack*Din, pack*Dout] block-diag
        bp = jnp.tile(b, (1, pack))          # [1, pack*Dout]
        packed.append((wp, bp))
    return packed


# ---------------------------------------------------------------------------
# Forward pass wrapper.
# ---------------------------------------------------------------------------
@functools.partial(
    jax.jit, static_argnames=("residual", "block_rows", "no_grid_max_rows"))
def unconstrained_net_forward(x, params, *, residual=True,
                              block_rows=4096, no_grid_max_rows=4096):
    """Fused forward pass of UnconstrainedNet (relu, no BN/dropout)."""
    B, din = x.shape
    num_layers = len(params)

    # Logical feature dims + residual flags (PyTorch: fires when shapes match).
    dims = [din]
    rowvec_last = False
    for i, (w, b) in enumerate(params):
        dout = b.shape[1]
        if i == num_layers - 1 and dout == 1 and w.shape == (1, dims[-1]):
            rowvec_last = True
        dims.append(dout)
    out_dim = dims[-1]
    res_flags = tuple(bool(residual and dims[i] == dims[i + 1])
                      for i in range(num_layers))

    # --- 4-way feature packing (lane-dense loads / VPU ops / MXU width). ----
    maxd = max(dims)
    pack = max(1, 128 // maxd)
    if pack > 1 and B >= pack and B % pack == 0:
        xk = x.reshape(B // pack, pack * din)          # contiguous row grouping
        params_k = _pack_params(params, pack)
        rowvec_k = False                               # final layer is (128, 4) now
        out_width = pack * out_dim
    else:
        pack = 1
        xk = x
        params_k = params
        rowvec_k = rowvec_last
        out_width = out_dim

    rows, in_width = xk.shape
    flat_wb = [a for wb in params_k for a in wb]
    kernel = _make_mlp_kernel(num_layers, res_flags, rowvec_k)

    # Advisory cost estimate (no pad/slice traffic any more).
    flops = sum(2 * rows * int(w.size) for (w, _b) in params_k)
    bytes_accessed = 4 * (int(xk.size) + sum(int(a.size) for a in flat_wb)
                          + rows * out_width)
    ce = pl.CostEstimate(flops=flops, transcendentals=0,
                         bytes_accessed=bytes_accessed)

    if rows <= no_grid_max_rows:
        # Whole working set in VMEM (<= ~2 MiB at the default cutoff): one DMA,
        # one kernel body, no pipeline prologue/epilogue. Best on 1-TC v5e/v6e.
        out = pl.pallas_call(
            kernel,
            out_shape=jax.ShapeDtypeStruct((rows, out_width), x.dtype),
            in_specs=[pl.BlockSpec(memory_space=pltpu.MemorySpace.VMEM)]
            * (1 + len(flat_wb)),
            out_specs=pl.BlockSpec(memory_space=pltpu.MemorySpace.VMEM),
            cost_estimate=ce,
        )(xk, *flat_wb)
    else:
        # Batch-tiled path. No padding: ragged last block is masked by Pallas.
        # Cap the block so there are always >= 2 grid steps ('parallel' axis can
        # then shard across both TensorCores on v7x).
        half = -(-rows // 2)                  # ceil(rows / 2)
        half = -(-half // 8) * 8              # round up to sublane multiple
        br = min(block_rows, half)
        br = max(8, (br // 8) * 8)
        grid = (pl.cdiv(rows, br),)

        in_specs = [pl.BlockSpec((br, in_width), lambda i: (i, 0))]
        for (w, b) in params_k:
            # Constant index_map -> weights/biases fetched once, stay resident.
            in_specs.append(pl.BlockSpec(w.shape, lambda i: (0, 0)))
            in_specs.append(pl.BlockSpec(b.shape, lambda i: (0, 0)))

        out = pl.pallas_call(
            kernel,
            out_shape=jax.ShapeDtypeStruct((rows, out_width), x.dtype),
            grid=grid,
            in_specs=in_specs,
            out_specs=pl.BlockSpec((br, out_width), lambda i: (i, 0)),
            compiler_params=pltpu.CompilerParams(
                dimension_semantics=("parallel",)),
            cost_estimate=ce,
        )(xk, *flat_wb)

    if pack > 1:
        out = out.reshape(B, out_dim)         # (B/4, 4) -> (B, 1), layout plumbing
    return out


# ---------------------------------------------------------------------------
# Pure-JAX reference with identical param layout.
# ---------------------------------------------------------------------------
def _reference_forward(x, params, *, residual=True):
    n = len(params)
    h = x
    for i, (w, b) in enumerate(params):
        last = i == n - 1
        if last and b.shape[1] == 1 and w.shape[0] == 1:
            y = h @ w.T + b
        else:
            y = h @ w + b
        if residual and y.shape == h.shape:
            y = y + h
        if not last:
            y = jnp.maximum(y, 0.0)
        h = y
    return h


if __name__ == "__main__":
    key = jax.random.PRNGKey(0)
    kp, k1, k2, k3 = jax.random.split(key, 4)

    input_dim, layer_dims = 32, [32, 32]
    params = init_params(kp, input_dim, layer_dims)

    # 1) Tiny batch: 4-way packed, whole-VMEM, no grid.
    x = jax.random.normal(k1, (8, input_dim), dtype=jnp.float32)
    out = jax.block_until_ready(unconstrained_net_forward(x, params, residual=True))
    ref = _reference_forward(x, params, residual=True)
    assert out.shape == (8, 1), out.shape
    assert jnp.allclose(out, ref, atol=1e-5, rtol=1e-5), "small-batch mismatch"

    # 2) Packed + batch-tiled grid with a ragged last block (no pad / no slice).
    xb = jax.random.normal(k2, (4100, input_dim), dtype=jnp.float32)
    outb = jax.block_until_ready(
        unconstrained_net_forward(xb, params, residual=True,
                                  block_rows=256, no_grid_max_rows=128))
    refb = _reference_forward(xb, params, residual=True)
    assert outb.shape == (4100, 1), outb.shape
    assert jnp.allclose(outb, refb, atol=1e-4, rtol=1e-5), "packed-tiled mismatch"

    # 3) Batch not divisible by the pack factor: unpacked fallback, tiled grid.
    xc = jax.random.normal(k3, (1030, input_dim), dtype=jnp.float32)
    outc = jax.block_until_ready(
        unconstrained_net_forward(xc, params, residual=True,
                                  block_rows=256, no_grid_max_rows=128))
    refc = _reference_forward(xc, params, residual=True)
    assert outc.shape == (1030, 1), outc.shape
    assert jnp.allclose(outc, refc, atol=1e-4, rtol=1e-5), "fallback-tiled mismatch"

    print("KERNEL_OK")
</pallas_src>

<mosaic_0001>
module attributes {stable_mosaic.version = 11 : i64} {
  func.func @kernel(%arg0: memref<2x128xf32, #tpu.memory_space<vmem>>, %arg1: memref<128x128xf32, #tpu.memory_space<vmem>>, %arg2: memref<1x128xf32, #tpu.memory_space<vmem>>, %arg3: memref<128x128xf32, #tpu.memory_space<vmem>>, %arg4: memref<1x128xf32, #tpu.memory_space<vmem>>, %arg5: memref<128x4xf32, #tpu.memory_space<vmem>>, %arg6: memref<1x4xf32, #tpu.memory_space<vmem>>, %arg7: memref<2x4xf32, #tpu.memory_space<vmem>>) attributes {dimension_semantics = [], scalar_prefetch = 0 : i64, scratch_operands = 0 : i64, tpu.core_type = #tpu.core_type<tc>} {
    %c0 = arith.constant 0 : index
    %c0_0 = arith.constant 0 : index
    %0 = vector.load %arg0[%c0, %c0_0] : memref<2x128xf32, #tpu.memory_space<vmem>>, vector<2x128xf32>
    %c0_1 = arith.constant 0 : index
    %c0_2 = arith.constant 0 : index
    %1 = vector.load %arg1[%c0_1, %c0_2] : memref<128x128xf32, #tpu.memory_space<vmem>>, vector<128x128xf32>
    %c0_3 = arith.constant 0 : index
    %c0_4 = arith.constant 0 : index
    %2 = vector.load %arg2[%c0_3, %c0_4] : memref<1x128xf32, #tpu.memory_space<vmem>>, vector<1x128xf32>
    %cst = arith.constant dense<0.000000e+00> : vector<2x128xf32>
    %3 = tpu.matmul %0, %1, %cst {dimension_numbers = #tpu.dot_dimension_numbers<[1], [0], [0], [1], [0, 0, 1, 1], [], []>, precision = #tpu.contract_precision<fp32>} : vector<2x128xf32>, vector<128x128xf32>, vector<2x128xf32> -> vector<2x128xf32>
    %4 = vector.broadcast %2 : vector<1x128xf32> to vector<2x128xf32>
    %5 = arith.addf %3, %4 : vector<2x128xf32>
    %6 = arith.addf %5, %0 : vector<2x128xf32>
    %cst_5 = arith.constant 0.000000e+00 : f32
    %7 = vector.broadcast %cst_5 : f32 to vector<2x128xf32>
    %8 = arith.maximumf %6, %7 : vector<2x128xf32>
    %c0_6 = arith.constant 0 : index
    %c0_7 = arith.constant 0 : index
    %9 = vector.load %arg3[%c0_6, %c0_7] : memref<128x128xf32, #tpu.memory_space<vmem>>, vector<128x128xf32>
    %c0_8 = arith.constant 0 : index
    %c0_9 = arith.constant 0 : index
    %10 = vector.load %arg4[%c0_8, %c0_9] : memref<1x128xf32, #tpu.memory_space<vmem>>, vector<1x128xf32>
    %cst_10 = arith.constant dense<0.000000e+00> : vector<2x128xf32>
    %11 = tpu.matmul %8, %9, %cst_10 {dimension_numbers = #tpu.dot_dimension_numbers<[1], [0], [0], [1], [0, 0, 1, 1], [], []>, precision = #tpu.contract_precision<fp32>} : vector<2x128xf32>, vector<128x128xf32>, vector<2x128xf32> -> vector<2x128xf32>
    %12 = vector.broadcast %10 : vector<1x128xf32> to vector<2x128xf32>
    %13 = arith.addf %11, %12 : vector<2x128xf32>
    %14 = arith.addf %13, %8 : vector<2x128xf32>
    %cst_11 = arith.constant 0.000000e+00 : f32
    %15 = vector.broadcast %cst_11 : f32 to vector<2x128xf32>
    %16 = arith.maximumf %14, %15 : vector<2x128xf32>
    %c0_12 = arith.constant 0 : index
    %c0_13 = arith.constant 0 : index
    %17 = vector.load %arg5[%c0_12, %c0_13] : memref<128x4xf32, #tpu.memory_space<vmem>>, vector<128x4xf32>
    %c0_14 = arith.constant 0 : index
    %c0_15 = arith.constant 0 : index
    %18 = vector.load %arg6[%c0_14, %c0_15] : memref<1x4xf32, #tpu.memory_space<vmem>>, vector<1x4xf32>
    %cst_16 = arith.constant dense<0.000000e+00> : vector<2x4xf32>
    %19 = tpu.matmul %16, %17, %cst_16 {dimension_numbers = #tpu.dot_dimension_numbers<[1], [0], [0], [1], [0, 0, 1, 1], [], []>, precision = #tpu.contract_precision<fp32>} : vector<2x128xf32>, vector<128x4xf32>, vector<2x4xf32> -> vector<2x4xf32>
    %20 = vector.broadcast %18 : vector<1x4xf32> to vector<2x4xf32>
    %21 = arith.addf %19, %20 : vector<2x4xf32>
    %c0_17 = arith.constant 0 : index
    %c0_18 = arith.constant 0 : index
    %22 = vector.load %arg7[%c0_17, %c0_18] : memref<2x4xf32, #tpu.memory_space<vmem>>, vector<2x4xf32>
    tpu.vector_store %arg7[%c0_17, %c0_18], %21 {strides = array<i32>} : memref<2x4xf32, #tpu.memory_space<vmem>>, vector<2x4xf32>,
    return
  }
}

</mosaic_0001>

<llo_original>
// kernel: unconstrained_net_forward.1
$region0: #{unconstrained_net_forward.1}
  #allocation0 [shape = 'u32[]', space=smem, size = 0x4, offset = 0x4, fixed_abs, tag = 'smem constant byte address 0x4 - core index']
  #allocation1 [shape = 'u32[144,128]{1,0:T(1,128)}', space=vmem, size = 0x12000, scoped, tag = 'internal scratch']
  %s0 = inlined_call_operand.vmem [shape: f32[2,128], index: 0, kind: input, shape index: {}]
  %s1 = inlined_call_operand.vmem [shape: f32[128,128], index: 1, kind: input, shape index: {}]
  %s2 = inlined_call_operand.vmem [shape: f32[1,128], index: 2, kind: input, shape index: {}]
  %s3 = inlined_call_operand.vmem [shape: f32[128,128], index: 3, kind: input, shape index: {}]
  %s4 = inlined_call_operand.vmem [shape: f32[1,128], index: 4, kind: input, shape index: {}]
  %s5 = inlined_call_operand.vmem [shape: f32[128,4], index: 5, kind: input, shape index: {}]
  %s6 = inlined_call_operand.vmem [shape: f32[1,4], index: 6, kind: input, shape index: {}]
  %s7 = inlined_call_operand.vmem [shape: f32[2,4], index: 7, kind: output, shape index: {}]
  %s8 = sld [smem:[#allocation0]]
  $region38: #{unconstrained_net_forward.1} parent=0
    _
  %s10 = ssub.s32 1, %s8
  %s11 = scalar_select 0, %s10, %s8
  // Predicated region
  $region2: #{unconstrained_net_forward.1} parent=0 // pred_check
    _
  $region3: #{unconstrained_net_forward.1} parent=0 // pred_check_branch
    %13 = sbr.rel (0) target = $region5
  $region4: #{unconstrained_net_forward.1} parent=0 // pred_region
    _
  $region5: #{unconstrained_net_forward.1} parent=0 // pred_fallthru
    _
  // Predicated region
  $region6: #{unconstrained_net_forward.1} parent=0 // pred_check
    _
  $region7: #{unconstrained_net_forward.1} parent=0 // pred_check_branch
    %15 = sbr.rel (0) target = $region9
  $region8: #{unconstrained_net_forward.1} parent=0 // pred_region
    _
  $region9: #{unconstrained_net_forward.1} parent=0 // pred_fallthru
    _
  // Predicated region
  $region10: #{unconstrained_net_forward.1} parent=0 // pred_check
    _
  $region11: #{unconstrained_net_forward.1} parent=0 // pred_check_branch
    %17 = sbr.rel (0) target = $region13
  $region12: #{unconstrained_net_forward.1} parent=0 // pred_region
    _
  $region13: #{unconstrained_net_forward.1} parent=0 // pred_fallthru
    _
  // Predicated region
  $region14: #{unconstrained_net_forward.1} parent=0 // pred_check
    _
  $region15: #{unconstrained_net_forward.1} parent=0 // pred_check_branch
    %19 = sbr.rel (0) target = $region17
  $region16: #{unconstrained_net_forward.1} parent=0 // pred_region
    _
  $region17: #{unconstrained_net_forward.1} parent=0 // pred_fallthru
    _
  // Predicated region
  $region18: #{unconstrained_net_forward.1} parent=0 // pred_check
    _
  $region19: #{unconstrained_net_forward.1} parent=0 // pred_check_branch
    %21 = sbr.rel (0) target = $region21
  $region20: #{unconstrained_net_forward.1} parent=0 // pred_region
    _
  $region21: #{unconstrained_net_forward.1} parent=0 // pred_fallthru
    _
  // Predicated region
  $region22: #{unconstrained_net_forward.1} parent=0 // pred_check
    _
  $region23: #{unconstrained_net_forward.1} parent=0 // pred_check_branch
    %23 = sbr.rel (0) target = $region25
  $region24: #{unconstrained_net_forward.1} parent=0 // pred_region
    _
  $region25: #{unconstrained_net_forward.1} parent=0 // pred_fallthru
    _
  // Predicated region
  $region26: #{unconstrained_net_forward.1} parent=0 // pred_check
    _
  $region27: #{unconstrained_net_forward.1} parent=0 // pred_check_branch
    %25 = sbr.rel (0) target = $region29
  $region28: #{unconstrained_net_forward.1} parent=0 // pred_region
    _
  $region29: #{unconstrained_net_forward.1} parent=0 // pred_fallthru
    _
  %v26 = vld [vmem:[%s0] sm:$0x3]
  %v27 = vld [vmem:[%s1] sm:$0xff]
  %v28 = vld [vmem:[%s1 + $0x8] sm:$0xff]
  %v29 = vld [vmem:[%s1 + $0x10] sm:$0xff]
  %v30 = vld [vmem:[%s1 + $0x18] sm:$0xff]
  %v31 = vld [vmem:[%s1 + $0x20] sm:$0xff]
  %v32 = vld [vmem:[%s1 + $0x28] sm:$0xff]
  %v33 = vld [vmem:[%s1 + $0x30] sm:$0xff]
  %v34 = vld [vmem:[%s1 + $0x38] sm:$0xff]
  %v35 = vld [vmem:[%s1 + $0x40] sm:$0xff]
  %v36 = vld [vmem:[%s1 + $0x48] sm:$0xff]
  %v37 = vld [vmem:[%s1 + $0x50] sm:$0xff]
  %v38 = vld [vmem:[%s1 + $0x58] sm:$0xff]
  %v39 = vld [vmem:[%s1 + $0x60] sm:$0xff]
  %v40 = vld [vmem:[%s1 + $0x68] sm:$0xff]
  %v41 = vld [vmem:[%s1 + $0x70] sm:$0xff]
  %v42 = vld [vmem:[%s1 + $0x78] sm:$0xff]
  %v43 = vld [vmem:[%s2] sm:$0x1]
  %v45 = vlaneseq
  %v46 = vshrl.u32 %v45, 7
  %v47 = vsub.s32 0, %v46
  %v48 = vrot.slane %v43, %v47
  %50 = vmatprep.subr.mxu0 0.0
  %v51 = vand.u32 %v42, 4294901760
  %52 = vmatpush1.msra.mxu0 %v51
  %53 = vmatprep.subr.mxu0 0.0
  %v54 = vand.u32 %v41, 4294901760
  %55 = vmatpush1.msra.mxu0 %v54
  %56 = vmatprep.subr.mxu0 0.0
  %v57 = vand.u32 %v40, 4294901760
  %58 = vmatpush1.msra.mxu0 %v57
  %59 = vmatprep.subr.mxu0 0.0
  %v60 = vand.u32 %v39, 4294901760
  %61 = vmatpush1.msra.mxu0 %v60
  %62 = vmatprep.subr.mxu0 0.0
  %v63 = vand.u32 %v38, 4294901760
  %64 = vmatpush1.msra.mxu0 %v63
  %65 = vmatprep.subr.mxu0 0.0
  %v66 = vand.u32 %v37, 4294901760
  %67 = vmatpush1.msra.mxu0 %v66
  %68 = vmatprep.subr.mxu0 0.0
  %v69 = vand.u32 %v36, 4294901760
  %70 = vmatpush1.msra.mxu0 %v69
  %71 = vmatprep.subr.mxu0 0.0
  %v72 = vand.u32 %v35, 4294901760
  %73 = vmatpush1.msra.mxu0 %v72
  %74 = vmatprep.subr.mxu0 0.0
  %v75 = vand.u32 %v34, 4294901760
  %76 = vmatpush1.msra.mxu0 %v75
  %77 = vmatprep.subr.mxu0 0.0
  %v78 = vand.u32 %v33, 4294901760
  %79 = vmatpush1.msra.mxu0 %v78
  %80 = vmatprep.subr.mxu0 0.0
  %v81 = vand.u32 %v32, 4294901760
  %82 = vmatpush1.msra.mxu0 %v81
  %83 = vmatprep.subr.mxu0 0.0
  %v84 = vand.u32 %v31, 4294901760
  %85 = vmatpush1.msra.mxu0 %v84
  %86 = vmatprep.subr.mxu0 0.0
  %v87 = vand.u32 %v30, 4294901760
  %88 = vmatpush1.msra.mxu0 %v87
  %89 = vmatprep.subr.mxu0 0.0
  %v90 = vand.u32 %v29, 4294901760
  %91 = vmatpush1.msra.mxu0 %v90
  %92 = vmatprep.subr.mxu0 0.0
  %v93 = vand.u32 %v28, 4294901760
  %94 = vmatpush1.msra.mxu0 %v93
  %95 = vmatprep.subr.mxu0 0.0
  %v96 = vand.u32 %v27, 4294901760
  %97 = vmatpush1.msra.mxu0 %v96
  %98 = vmatprep.subr.mxu0 0.0
  %99 = vmatpush2.msra.mxu0 0.0
  %100 = vmatprep.subr.mxu0 0.0
  %101 = vmatpush2.msra.mxu0 0.0
  %102 = vmatprep.subr.mxu0 0.0
  %103 = vmatpush2.msra.mxu0 0.0
  %104 = vmatprep.subr.mxu0 0.0
  %105 = vmatpush2.msra.mxu0 0.0
  %106 = vmatprep.subr.mxu0 0.0
  %107 = vmatpush2.msra.mxu0 0.0
  %108 = vmatprep.subr.mxu0 0.0
  %109 = vmatpush2.msra.mxu0 0.0
  %110 = vmatprep.subr.mxu0 0.0
  %111 = vmatpush2.msra.mxu0 0.0
  %112 = vmatprep.subr.mxu0 0.0
  %113 = vmatpush2.msra.mxu0 0.0
  %114 = vmatprep.subr.mxu0 0.0
  %115 = vmatpush2.msra.mxu0 0.0
  %116 = vmatprep.subr.mxu0 0.0
  %117 = vmatpush2.msra.mxu0 0.0
  %118 = vmatprep.subr.mxu0 0.0
  %119 = vmatpush2.msra.mxu0 0.0
  %120 = vmatprep.subr.mxu0 0.0
  %121 = vmatpush2.msra.mxu0 0.0
  %122 = vmatprep.subr.mxu0 0.0
  %123 = vmatpush2.msra.mxu0 0.0
  %124 = vmatprep.subr.mxu0 0.0
  %125 = vmatpush2.msra.mxu0 0.0
  %126 = vmatprep.subr.mxu0 0.0
  %127 = vmatpush2.msra.mxu0 0.0
  %128 = vmatprep.subr.mxu0 0.0
  %129 = vmatpush2.msra.mxu0 0.0
  %130 = vmatprep.mubr.f32.mxu0 0.0
  %v131 = vand.u32 %v26, 4294901760
  %v132 = vsub.f32 %v26, %v131
  %v133 = vand.u32 %v132, 4294901760
  %v134 = vsub.f32 %v132, %v133
  %v135 = vand.u32 %v134, 4294901760
  %136 = vmatmul.mubr.f32.gmra.mxu0 %v135
  %v137 = vpop.f32.mrf.mxu0
  %v138 = vadd.f32 %v48, %v137
  %v139 = vpop.f32.mrf.mxu0
  %140 = vdwg.mxu0
  %141 = vmatprep.subr.mxu0 0.0
  %v142 = vand.u32 %v42, 4294901760
  %v143 = vsub.f32 %v42, %v142
  %v144 = vand.u32 %v143, 4294901760
  %v145 = vsub.f32 %v143, %v144
  %v146 = vand.u32 %v145, 4294901760
  %147 = vmatpush1.msra.mxu0 %v146
  %148 = vmatprep.subr.mxu0 0.0
  %v149 = vand.u32 %v41, 4294901760
  %v150 = vsub.f32 %v41, %v149
  %v151 = vand.u32 %v150, 4294901760
  %v152 = vsub.f32 %v150, %v151
  %v153 = vand.u32 %v152, 4294901760
  %154 = vmatpush1.msra.mxu0 %v153
  %155 = vmatprep.subr.mxu0 0.0
  %v156 = vand.u32 %v40, 4294901760
  %v157 = vsub.f32 %v40, %v156
  %v158 = vand.u32 %v157, 4294901760
  %v159 = vsub.f32 %v157, %v158
  %v160 = vand.u32 %v159, 4294901760
  %161 = vmatpush1.msra.mxu0 %v160
  %162 = vmatprep.subr.mxu0 0.0
  %v163 = vand.u32 %v39, 4294901760
  %v164 = vsub.f32 %v39, %v163
  %v165 = vand.u32 %v164, 4294901760
  %v166 = vsub.f32 %v164, %v165
  %v167 = vand.u32 %v166, 4294901760
  %168 = vmatpush1.msra.mxu0 %v167
  %169 = vmatprep.subr.mxu0 0.0
  %v170 = vand.u32 %v38, 4294901760
  %v171 = vsub.f32 %v38, %v170
  %v172 = vand.u32 %v171, 4294901760
  %v173 = vsub.f32 %v171, %v172
  %v174 = vand.u32 %v173, 4294901760
  %175 = vmatpush1.msra.mxu0 %v174
  %176 = vmatprep.subr.mxu0 0.0
  %v177 = vand.u32 %v37, 4294901760
  %v178 = vsub.f32 %v37, %v177
  %v179 = vand.u32 %v178, 4294901760
  %v180 = vsub.f32 %v178, %v179
  %v181 = vand.u32 %v180, 4294901760
  %182 = vmatpush1.msra.mxu0 %v181
  %183 = vmatprep.subr.mxu0 0.0
  %v184 = vand.u32 %v36, 4294901760
  %v185 = vsub.f32 %v36, %v184
  %v186 = vand.u32 %v185, 4294901760
  %v187 = vsub.f32 %v185, %v186
  %v188 = vand.u32 %v187, 4294901760
  %189 = vmatpush1.msra.mxu0 %v188
  %190 = vmatprep.subr.mxu0 0.0
  %v191 = vand.u32 %v35, 4294901760
  %v192 = vsub.f32 %v35, %v191
  %v193 = vand.u32 %v192, 4294901760
  %v194 = vsub.f32 %v192, %v193
  %v195 = vand.u32 %v194, 4294901760
  %196 = vmatpush1.msra.mxu0 %v195
  %197 = vmatprep.subr.mxu0 0.0
  %v198 = vand.u32 %v34, 4294901760
  %v199 = vsub.f32 %v34, %v198
  %v200 = vand.u32 %v199, 4294901760
  %v201 = vsub.f32 %v199, %v200
  %v202 = vand.u32 %v201, 4294901760
  %203 = vmatpush1.msra.mxu0 %v202
  %204 = vmatprep.subr.mxu0 0.0
  %v205 = vand.u32 %v33, 4294901760
  %v206 = vsub.f32 %v33, %v205
  %v207 = vand.u32 %v206, 4294901760
  %v208 = vsub.f32 %v206, %v207
  %v209 = vand.u32 %v208, 4294901760
  %210 = vmatpush1.msra.mxu0 %v209
  %211 = vmatprep.subr.mxu0 0.0
  %v212 = vand.u32 %v32, 4294901760
  %v213 = vsub.f32 %v32, %v212
  %v214 = vand.u32 %v213, 4294901760
  %v215 = vsub.f32 %v213, %v214
  %v216 = vand.u32 %v215, 4294901760
  %217 = vmatpush1.msra.mxu0 %v216
  %218 = vmatprep.subr.mxu0 0.0
  %v219 = vand.u32 %v31, 4294901760
  %v220 = vsub.f32 %v31, %v219
  %v221 = vand.u32 %v220, 4294901760
  %v222 = vsub.f32 %v220, %v221
  %v223 = vand.u32 %v222, 4294901760
  %224 = vmatpush1.msra.mxu0 %v223
  %225 = vmatprep.subr.mxu0 0.0
  %v226 = vand.u32 %v30, 4294901760
  %v227 = vsub.f32 %v30, %v226
  %v228 = vand.u32 %v227, 4294901760
  %v229 = vsub.f32 %v227, %v228
  %v230 = vand.u32 %v229, 4294901760
  %231 = vmatpush1.msra.mxu0 %v230
  %232 = vmatprep.subr.mxu0 0.0
  %v233 = vand.u32 %v29, 4294901760
  %v234 = vsub.f32 %v29, %v233
  %v235 = vand.u32 %v234, 4294901760
  %v236 = vsub.f32 %v234, %v235
  %v237 = vand.u32 %v236, 4294901760
  %238 = vmatpush1.msra.mxu0 %v237
  %239 = vmatprep.subr.mxu0 0.0
  %v240 = vand.u32 %v28, 4294901760
  %v241 = vsub.f32 %v28, %v240
  %v242 = vand.u32 %v241, 4294901760
  %v243 = vsub.f32 %v241, %v242
  %v244 = vand.u32 %v243, 4294901760
  %245 = vmatpush1.msra.mxu0 %v244
  %246 = vmatprep.subr.mxu0 0.0
  %v247 = vand.u32 %v27, 4294901760
  %v248 = vsub.f32 %v27, %v247
  %v249 = vand.u32 %v248, 4294901760
  %v250 = vsub.f32 %v248, %v249
  %v251 = vand.u32 %v250, 4294901760
  %252 = vmatpush1.msra.mxu0 %v251
  %253 = vmatprep.subr.mxu0 0.0
  %254 = vmatpush2.msra.mxu0 0.0
  %255 = vmatprep.subr.mxu0 0.0
  %256 = vmatpush2.msra.mxu0 0.0
  %257 = vmatprep.subr.mxu0 0.0
  %258 = vmatpush2.msra.mxu0 0.0
  %259 = vmatprep.subr.mxu0 0.0
  %260 = vmatpush2.msra.mxu0 0.0
  %261 = vmatprep.subr.mxu0 0.0
  %262 = vmatpush2.msra.mxu0 0.0
  %263 = vmatprep.subr.mxu0 0.0
  %264 = vmatpush2.msra.mxu0 0.0
  %265 = vmatprep.subr.mxu0 0.0
  %266 = vmatpush2.msra.mxu0 0.0
  %267 = vmatprep.subr.mxu0 0.0
  %268 = vmatpush2.msra.mxu0 0.0
  %269 = vmatprep.subr.mxu0 0.0
  %270 = vmatpush2.msra.mxu0 0.0
  %271 = vmatprep.subr.mxu0 0.0
  %272 = vmatpush2.msra.mxu0 0.0
  %273 = vmatprep.subr.mxu0 0.0
  %274 = vmatpush2.msra.mxu0 0.0
  %275 = vmatprep.subr.mxu0 0.0
  %276 = vmatpush2.msra.mxu0 0.0
  %277 = vmatprep.subr.mxu0 0.0
  %278 = vmatpush2.msra.mxu0 0.0
  %279 = vmatprep.subr.mxu0 0.0
  %280 = vmatpush2.msra.mxu0 0.0
  %281 = vmatprep.subr.mxu0 0.0
  %282 = vmatpush2.msra.mxu0 0.0
  %283 = vmatprep.subr.mxu0 0.0
  %284 = vmatpush2.msra.mxu0 0.0
  %285 = vmatprep.mubr.f32.mxu0 0.0
  %v286 = vand.u32 %v26, 4294901760
  %287 = vmatmul.mubr.f32.gmra.mxu0 %v286
  %v288 = vpop.f32.mrf.mxu0
  %v289 = vadd.f32 %v138, %v288
  %v290 = vpop.f32.mrf.mxu0
  %291 = vdwg.mxu0
  %292 = vmatprep.subr.mxu0 0.0
  %v293 = vand.u32 %v42, 4294901760
  %v294 = vsub.f32 %v42, %v293
  %295 = vmatpush1.msra.mxu0 %v294
  %296 = vmatprep.subr.mxu0 0.0
  %v297 = vand.u32 %v41, 4294901760
  %v298 = vsub.f32 %v41, %v297
  %299 = vmatpush1.msra.mxu0 %v298
  %300 = vmatprep.subr.mxu0 0.0
  %v301 = vand.u32 %v40, 4294901760
  %v302 = vsub.f32 %v40, %v301
  %303 = vmatpush1.msra.mxu0 %v302
  %304 = vmatprep.subr.mxu0 0.0
  %v305 = vand.u32 %v39, 4294901760
  %v306 = vsub.f32 %v39, %v305
  %307 = vmatpush1.msra.mxu0 %v306
  %308 = vmatprep.subr.mxu0 0.0
  %v309 = vand.u32 %v38, 4294901760
  %v310 = vsub.f32 %v38, %v309
  %311 = vmatpush1.msra.mxu0 %v310
  %312 = vmatprep.subr.mxu0 0.0
  %v313 = vand.u32 %v37, 4294901760
  %v314 = vsub.f32 %v37, %v313
  %315 = vmatpush1.msra.mxu0 %v314
  %316 = vmatprep.subr.mxu0 0.0
  %v317 = vand.u32 %v36, 4294901760
  %v318 = vsub.f32 %v36, %v317
  %319 = vmatpush1.msra.mxu0 %v318
  %320 = vmatprep.subr.mxu0 0.0
  %v321 = vand.u32 %v35, 4294901760
  %v322 = vsub.f32 %v35, %v321
  %323 = vmatpush1.msra.mxu0 %v322
  %324 = vmatprep.subr.mxu0 0.0
  %v325 = vand.u32 %v34, 4294901760
  %v326 = vsub.f32 %v34, %v325
  %327 = vmatpush1.msra.mxu0 %v326
  %328 = vmatprep.subr.mxu0 0.0
  %v329 = vand.u32 %v33, 4294901760
  %v330 = vsub.f32 %v33, %v329
  %331 = vmatpush1.msra.mxu0 %v330
  %332 = vmatprep.subr.mxu0 0.0
  %v333 = vand.u32 %v32, 4294901760
  %v334 = vsub.f32 %v32, %v333
  %335 = vmatpush1.msra.mxu0 %v334
  %336 = vmatprep.subr.mxu0 0.0
  %v337 = vand.u32 %v31, 4294901760
  %v338 = vsub.f32 %v31, %v337
  %339 = vmatpush1.msra.mxu0 %v338
  %340 = vmatprep.subr.mxu0 0.0
  %v341 = vand.u32 %v30, 4294901760
  %v342 = vsub.f32 %v30, %v341
  %343 = vmatpush1.msra.mxu0 %v342
  %344 = vmatprep.subr.mxu0 0.0
  %v345 = vand.u32 %v29, 4294901760
  %v346 = vsub.f32 %v29, %v345
  %347 = vmatpush1.msra.mxu0 %v346
  %348 = vmatprep.subr.mxu0 0.0
  %v349 = vand.u32 %v28, 4294901760
  %v350 = vsub.f32 %v28, %v349
  %351 = vmatpush1.msra.mxu0 %v350
  %352 = vmatprep.subr.mxu0 0.0
  %v353 = vand.u32 %v27, 4294901760
  %v354 = vsub.f32 %v27, %v353
  %355 = vmatpush1.msra.mxu0 %v354
  %356 = vmatprep.subr.mxu0 0.0
  %357 = vmatpush2.msra.mxu0 0.0
  %358 = vmatprep.subr.mxu0 0.0
  %359 = vmatpush2.msra.mxu0 0.0
  %360 = vmatprep.subr.mxu0 0.0
  %361 = vmatpush2.msra.mxu0 0.0
  %362 = vmatprep.subr.mxu0 0.0
  %363 = vmatpush2.msra.mxu0 0.0
  %364 = vmatprep.subr.mxu0 0.0
  %365 = vmatpush2.msra.mxu0 0.0
  %366 = vmatprep.subr.mxu0 0.0
  %367 = vmatpush2.msra.mxu0 0.0
  %368 = vmatprep.subr.mxu0 0.0
  %369 = vmatpush2.msra.mxu0 0.0
  %370 = vmatprep.subr.mxu0 0.0
  %371 = vmatpush2.msra.mxu0 0.0
  %372 = vmatprep.subr.mxu0 0.0
  %373 = vmatpush2.msra.mxu0 0.0
  %374 = vmatprep.subr.mxu0 0.0
  %375 = vmatpush2.msra.mxu0 0.0
  %376 = vmatprep.subr.mxu0 0.0
  %377 = vmatpush2.msra.mxu0 0.0
  %378 = vmatprep.subr.mxu0 0.0
  %379 = vmatpush2.msra.mxu0 0.0
  %380 = vmatprep.subr.mxu0 0.0
  %381 = vmatpush2.msra.mxu0 0.0
  %382 = vmatprep.subr.mxu0 0.0
  %383 = vmatpush2.msra.mxu0 0.0
  %384 = vmatprep.subr.mxu0 0.0
  %385 = vmatpush2.msra.mxu0 0.0
  %386 = vmatprep.subr.mxu0 0.0
  %387 = vmatpush2.msra.mxu0 0.0
  %388 = vmatprep.mubr.f32.mxu0 0.0
  %v389 = vand.u32 %v26, 4294901760
  %v390 = vsub.f32 %v26, %v389
  %391 = vmatmul.mubr.f32.gmra.mxu0 %v390
  %v392 = vpop.f32.mrf.mxu0
  %v393 = vadd.f32 %v289, %v392
  %v394 = vpop.f32.mrf.mxu0
  %395 = vdwg.mxu0
  %396 = vmatprep.subr.mxu0 0.0
  %v397 = vand.u32 %v42, 4294901760
  %398 = vmatpush1.msra.mxu0 %v397
  %399 = vmatprep.subr.mxu0 0.0
  %v400 = vand.u32 %v41, 4294901760
  %401 = vmatpush1.msra.mxu0 %v400
  %402 = vmatprep.subr.mxu0 0.0
  %v403 = vand.u32 %v40, 4294901760
  %404 = vmatpush1.msra.mxu0 %v403
  %405 = vmatprep.subr.mxu0 0.0
  %v406 = vand.u32 %v39, 4294901760
  %407 = vmatpush1.msra.mxu0 %v406
  %408 = vmatprep.subr.mxu0 0.0
  %v409 = vand.u32 %v38, 4294901760
  %410 = vmatpush1.msra.mxu0 %v409
  %411 = vmatprep.subr.mxu0 0.0
  %v412 = vand.u32 %v37, 4294901760
  %413 = vmatpush1.msra.mxu0 %v412
  %414 = vmatprep.subr.mxu0 0.0
  %v415 = vand.u32 %v36, 4294901760
  %416 = vmatpush1.msra.mxu0 %v415
  %417 = vmatprep.subr.mxu0 0.0
  %v418 = vand.u32 %v35, 4294901760
  %419 = vmatpush1.msra.mxu0 %v418
  %420 = vmatprep.subr.mxu0 0.0
  %v421 = vand.u32 %v34, 4294901760
  %422 = vmatpush1.msra.mxu0 %v421
  %423 = vmatprep.subr.mxu0 0.0
  %v424 = vand.u32 %v33, 4294901760
  %425 = vmatpush1.msra.mxu0 %v424
  %426 = vmatprep.subr.mxu0 0.0
  %v427 = vand.u32 %v32, 4294901760
  %428 = vmatpush1.msra.mxu0 %v427
  %429 = vmatprep.subr.mxu0 0.0
  %v430 = vand.u32 %v31, 4294901760
  %431 = vmatpush1.msra.mxu0 %v430
  %432 = vmatprep.subr.mxu0 0.0
  %v433 = vand.u32 %v30, 4294901760
  %434 = vmatpush1.msra.mxu0 %v433
  %435 = vmatprep.subr.mxu0 0.0
  %v436 = vand.u32 %v29, 4294901760
  %437 = vmatpush1.msra.mxu0 %v436
  %438 = vmatprep.subr.mxu0 0.0
  %v439 = vand.u32 %v28, 4294901760
  %440 = vmatpush1.msra.mxu0 %v439
  %441 = vmatprep.subr.mxu0 0.0
  %v442 = vand.u32 %v27, 4294901760
  %443 = vmatpush1.msra.mxu0 %v442
  %444 = vmatprep.subr.mxu0 0.0
  %445 = vmatpush2.msra.mxu0 0.0
  %446 = vmatprep.subr.mxu0 0.0
  %447 = vmatpush2.msra.mxu0 0.0
  %448 = vmatprep.subr.mxu0 0.0
  %449 = vmatpush2.msra.mxu0 0.0
  %450 = vmatprep.subr.mxu0 0.0
  %451 = vmatpush2.msra.mxu0 0.0
  %452 = vmatprep.subr.mxu0 0.0
  %453 = vmatpush2.msra.mxu0 0.0
  %454 = vmatprep.subr.mxu0 0.0
  %455 = vmatpush2.msra.mxu0 0.0
  %456 = vmatprep.subr.mxu0 0.0
  %457 = vmatpush2.msra.mxu0 0.0
  %458 = vmatprep.subr.mxu0 0.0
  %459 = vmatpush2.msra.mxu0 0.0
  %460 = vmatprep.subr.mxu0 0.0
  %461 = vmatpush2.msra.mxu0 0.0
  %462 = vmatprep.subr.mxu0 0.0
  %463 = vmatpush2.msra.mxu0 0.0
  %464 = vmatprep.subr.mxu0 0.0
  %465 = vmatpush2.msra.mxu0 0.0
  %466 = vmatprep.subr.mxu0 0.0
  %467 = vmatpush2.msra.mxu0 0.0
  %468 = vmatprep.subr.mxu0 0.0
  %469 = vmatpush2.msra.mxu0 0.0
  %470 = vmatprep.subr.mxu0 0.0
  %471 = vmatpush2.msra.mxu0 0.0
  %472 = vmatprep.subr.mxu0 0.0
  %473 = vmatpush2.msra.mxu0 0.0
  %474 = vmatprep.subr.mxu0 0.0
  %475 = vmatpush2.msra.mxu0 0.0
  %476 = vmatprep.mubr.f32.mxu0 0.0
  %v477 = vand.u32 %v26, 4294901760
  %v478 = vsub.f32 %v26, %v477
  %v479 = vand.u32 %v478, 4294901760
  %480 = vmatmul.mubr.f32.gmra.mxu0 %v479
  %v481 = vpop.f32.mrf.mxu0
  %v482 = vadd.f32 %v393, %v481
  %v483 = vpop.f32.mrf.mxu0
  %484 = vdwg.mxu0
  %485 = vmatprep.subr.mxu0 0.0
  %v486 = vand.u32 %v42, 4294901760
  %v487 = vsub.f32 %v42, %v486
  %v488 = vand.u32 %v487, 4294901760
  %489 = vmatpush1.msra.mxu0 %v488
  %490 = vmatprep.subr.mxu0 0.0
  %v491 = vand.u32 %v41, 4294901760
  %v492 = vsub.f32 %v41, %v491
  %v493 = vand.u32 %v492, 4294901760
  %494 = vmatpush1.msra.mxu0 %v493
  %495 = vmatprep.subr.mxu0 0.0
  %v496 = vand.u32 %v40, 4294901760
  %v497 = vsub.f32 %v40, %v496
  %v498 = vand.u32 %v497, 4294901760
  %499 = vmatpush1.msra.mxu0 %v498
  %500 = vmatprep.subr.mxu0 0.0
  %v501 = vand.u32 %v39, 4294901760
  %v502 = vsub.f32 %v39, %v501
  %v503 = vand.u32 %v502, 4294901760
  %504 = vmatpush1.msra.mxu0 %v503
  %505 = vmatprep.subr.mxu0 0.0
  %v506 = vand.u32 %v38, 4294901760
  %v507 = vsub.f32 %v38, %v506
  %v508 = vand.u32 %v507, 4294901760
  %509 = vmatpush1.msra.mxu0 %v508
  %510 = vmatprep.subr.mxu0 0.0
  %v511 = vand.u32 %v37, 4294901760
  %v512 = vsub.f32 %v37, %v511
  %v513 = vand.u32 %v512, 4294901760
  %514 = vmatpush1.msra.mxu0 %v513
  %515 = vmatprep.subr.mxu0 0.0
  %v516 = vand.u32 %v36, 4294901760
  %v517 = vsub.f32 %v36, %v516
  %v518 = vand.u32 %v517, 4294901760
  %519 = vmatpush1.msra.mxu0 %v518
  %520 = vmatprep.subr.mxu0 0.0
  %v521 = vand.u32 %v35, 4294901760
  %v522 = vsub.f32 %v35, %v521
  %v523 = vand.u32 %v522, 4294901760
  %524 = vmatpush1.msra.mxu0 %v523
  %525 = vmatprep.subr.mxu0 0.0
  %v526 = vand.u32 %v34, 4294901760
  %v527 = vsub.f32 %v34, %v526
  %v528 = vand.u32 %v527, 4294901760
  %529 = vmatpush1.msra.mxu0 %v528
  %530 = vmatprep.subr.mxu0 0.0
  %v531 = vand.u32 %v33, 4294901760
  %v532 = vsub.f32 %v33, %v531
  %v533 = vand.u32 %v532, 4294901760
  %534 = vmatpush1.msra.mxu0 %v533
  %535 = vmatprep.subr.mxu0 0.0
  %v536 = vand.u32 %v32, 4294901760
  %v537 = vsub.f32 %v32, %v536
  %v538 = vand.u32 %v537, 4294901760
  %539 = vmatpush1.msra.mxu0 %v538
  %540 = vmatprep.subr.mxu0 0.0
  %v541 = vand.u32 %v31, 4294901760
  %v542 = vsub.f32 %v31, %v541
  %v543 = vand.u32 %v542, 4294901760
  %544 = vmatpush1.msra.mxu0 %v543
  %545 = vmatprep.subr.mxu0 0.0
  %v546 = vand.u32 %v30, 4294901760
  %v547 = vsub.f32 %v30, %v546
  %v548 = vand.u32 %v547, 4294901760
  %549 = vmatpush1.msra.mxu0 %v548
  %550 = vmatprep.subr.mxu0 0.0
  %v551 = vand.u32 %v29, 4294901760
  %v552 = vsub.f32 %v29, %v551
  %v553 = vand.u32 %v552, 4294901760
  %554 = vmatpush1.msra.mxu0 %v553
  %555 = vmatprep.subr.mxu0 0.0
  %v556 = vand.u32 %v28, 4294901760
  %v557 = vsub.f32 %v28, %v556
  %v558 = vand.u32 %v557, 4294901760
  %559 = vmatpush1.msra.mxu0 %v558
  %560 = vmatprep.subr.mxu0 0.0
  %v561 = vand.u32 %v27, 4294901760
  %v562 = vsub.f32 %v27, %v561
  %v563 = vand.u32 %v562, 4294901760
  %564 = vmatpush1.msra.mxu0 %v563
  %565 = vmatprep.subr.mxu0 0.0
  %566 = vmatpush2.msra.mxu0 0.0
  %567 = vmatprep.subr.mxu0 0.0
  %568 = vmatpush2.msra.mxu0 0.0
  %569 = vmatprep.subr.mxu0 0.0
  %570 = vmatpush2.msra.mxu0 0.0
  %571 = vmatprep.subr.mxu0 0.0
  %572 = vmatpush2.msra.mxu0 0.0
  %573 = vmatprep.subr.mxu0 0.0
  %574 = vmatpush2.msra.mxu0 0.0
  %575 = vmatprep.subr.mxu0 0.0
  %576 = vmatpush2.msra.mxu0 0.0
  %577 = vmatprep.subr.mxu0 0.0
  %578 = vmatpush2.msra.mxu0 0.0
  %579 = vmatprep.subr.mxu0 0.0
  %580 = vmatpush2.msra.mxu0 0.0
  %581 = vmatprep.subr.mxu0 0.0
  %582 = vmatpush2.msra.mxu0 0.0
  %583 = vmatprep.subr.mxu0 0.0
  %584 = vmatpush2.msra.mxu0 0.0
  %585 = vmatprep.subr.mxu0 0.0
  %586 = vmatpush2.msra.mxu0 0.0
  %587 = vmatprep.subr.mxu0 0.0
  %588 = vmatpush2.msra.mxu0 0.0
  %589 = vmatprep.subr.mxu0 0.0
  %590 = vmatpush2.msra.mxu0 0.0
  %591 = vmatprep.subr.mxu0 0.0
  %592 = vmatpush2.msra.mxu0 0.0
  %593 = vmatprep.subr.mxu0 0.0
  %594 = vmatpush2.msra.mxu0 0.0
  %595 = vmatprep.subr.mxu0 0.0
  %596 = vmatpush2.msra.mxu0 0.0
  %597 = vmatprep.mubr.f32.mxu0 0.0
  %v598 = vand.u32 %v26, 4294901760
  %599 = vmatmul.mubr.f32.gmra.mxu0 %v598
  %v600 = vpop.f32.mrf.mxu0
  %v601 = vadd.f32 %v482, %v600
  %v602 = vpop.f32.mrf.mxu0
  %603 = vdwg.mxu0
  %604 = vmatprep.subr.mxu0 0.0
  %v605 = vand.u32 %v42, 4294901760
  %606 = vmatpush1.msra.mxu0 %v605
  %607 = vmatprep.subr.mxu0 0.0
  %v608 = vand.u32 %v41, 4294901760
  %609 = vmatpush1.msra.mxu0 %v608
  %610 = vmatprep.subr.mxu0 0.0
  %v611 = vand.u32 %v40, 4294901760
  %612 = vmatpush1.msra.mxu0 %v611
  %613 = vmatprep.subr.mxu0 0.0
  %v614 = vand.u32 %v39, 4294901760
  %615 = vmatpush1.msra.mxu0 %v614
  %616 = vmatprep.subr.mxu0 0.0
  %v617 = vand.u32 %v38, 4294901760
  %618 = vmatpush1.msra.mxu0 %v617
  %619 = vmatprep.subr.mxu0 0.0
  %v620 = vand.u32 %v37, 4294901760
  %621 = vmatpush1.msra.mxu0 %v620
  %622 = vmatprep.subr.mxu0 0.0
  %v623 = vand.u32 %v36, 4294901760
  %624 = vmatpush1.msra.mxu0 %v623
  %625 = vmatprep.subr.mxu0 0.0
  %v626 = vand.u32 %v35, 4294901760
  %627 = vmatpush1.msra.mxu0 %v626
  %628 = vmatprep.subr.mxu0 0.0
  %v629 = vand.u32 %v34, 4294901760
  %630 = vmatpush1.msra.mxu0 %v629
  %631 = vmatprep.subr.mxu0 0.0
  %v632 = vand.u32 %v33, 4294901760
  %633 = vmatpush1.msra.mxu0 %v632
  %634 = vmatprep.subr.mxu0 0.0
  %v635 = vand.u32 %v32, 4294901760
  %636 = vmatpush1.msra.mxu0 %v635
  %637 = vmatprep.subr.mxu0 0.0
  %v638 = vand.u32 %v31, 4294901760
  %639 = vmatpush1.msra.mxu0 %v638
  %640 = vmatprep.subr.mxu0 0.0
  %v641 = vand.u32 %v30, 4294901760
  %642 = vmatpush1.msra.mxu0 %v641
  %643 = vmatprep.subr.mxu0 0.0
  %v644 = vand.u32 %v29, 4294901760
  %645 = vmatpush1.msra.mxu0 %v644
  %646 = vmatprep.subr.mxu0 0.0
  %v647 = vand.u32 %v28, 4294901760
  %648 = vmatpush1.msra.mxu0 %v647
  %649 = vmatprep.subr.mxu0 0.0
  %v650 = vand.u32 %v27, 4294901760
  %651 = vmatpush1.msra.mxu0 %v650
  %652 = vmatprep.subr.mxu0 0.0
  %653 = vmatpush2.msra.mxu0 0.0
  %654 = vmatprep.subr.mxu0 0.0
  %655 = vmatpush2.msra.mxu0 0.0
  %656 = vmatprep.subr.mxu0 0.0
  %657 = vmatpush2.msra.mxu0 0.0
  %658 = vmatprep.subr.mxu0 0.0
  %659 = vmatpush2.msra.mxu0 0.0
  %660 = vmatprep.subr.mxu0 0.0
  %661 = vmatpush2.msra.mxu0 0.0
  %662 = vmatprep.subr.mxu0 0.0
  %663 = vmatpush2.msra.mxu0 0.0
  %664 = vmatprep.subr.mxu0 0.0
  %665 = vmatpush2.msra.mxu0 0.0
  %666 = vmatprep.subr.mxu0 0.0
  %667 = vmatpush2.msra.mxu0 0.0
  %668 = vmatprep.subr.mxu0 0.0
  %669 = vmatpush2.msra.mxu0 0.0
  %670 = vmatprep.subr.mxu0 0.0
  %671 = vmatpush2.msra.mxu0 0.0
  %672 = vmatprep.subr.mxu0 0.0
  %673 = vmatpush2.msra.mxu0 0.0
  %674 = vmatprep.subr.mxu0 0.0
  %675 = vmatpush2.msra.mxu0 0.0
  %676 = vmatprep.subr.mxu0 0.0
  %677 = vmatpush2.msra.mxu0 0.0
  %678 = vmatprep.subr.mxu0 0.0
  %679 = vmatpush2.msra.mxu0 0.0
  %680 = vmatprep.subr.mxu0 0.0
  %681 = vmatpush2.msra.mxu0 0.0
  %682 = vmatprep.subr.mxu0 0.0
  %683 = vmatpush2.msra.mxu0 0.0
  %684 = vmatprep.mubr.f32.mxu0 0.0
  %v685 = vand.u32 %v26, 4294901760
  %686 = vmatmul.mubr.f32.gmra.mxu0 %v685
  %v687 = vpop.f32.mrf.mxu0
  %v688 = vadd.f32 %v601, %v687
  %v689 = vpop.f32.mrf.mxu0
  %690 = vdwg.mxu0
  %v691 = vadd.f32 %v688, %v26
  %v692 = vmax.f32 %v691, 0.0
  %v693 = vld [vmem:[%s3] sm:$0xff]
  %v694 = vld [vmem:[%s3 + $0x8] sm:$0xff]
  %v695 = vld [vmem:[%s3 + $0x10] sm:$0xff]
  %v696 = vld [vmem:[%s3 + $0x18] sm:$0xff]
  %v697 = vld [vmem:[%s3 + $0x20] sm:$0xff]
  %v698 = vld [vmem:[%s3 + $0x28] sm:$0xff]
  %v699 = vld [vmem:[%s3 + $0x30] sm:$0xff]
  %v700 = vld [vmem:[%s3 + $0x38] sm:$0xff]
  %v701 = vld [vmem:[%s3 + $0x40] sm:$0xff]
  %v702 = vld [vmem:[%s3 + $0x48] sm:$0xff]
  %v703 = vld [vmem:[%s3 + $0x50] sm:$0xff]
  %v704 = vld [vmem:[%s3 + $0x58] sm:$0xff]
  %v705 = vld [vmem:[%s3 + $0x60] sm:$0xff]
  %v706 = vld [vmem:[%s3 + $0x68] sm:$0xff]
  %v707 = vld [vmem:[%s3 + $0x70] sm:$0xff]
  %v708 = vld [vmem:[%s3 + $0x78] sm:$0xff]
  %v709 = vld [vmem:[%s4] sm:$0x1]
  %v711 = vlaneseq
  %v712 = vshrl.u32 %v711, 7
  %v713 = vsub.s32 0, %v712
  %v714 = vrot.slane %v709, %v713
  %716 = vmatprep.subr.mxu0 0.0
  %v717 = vand.u32 %v708, 4294901760
  %718 = vmatpush1.msra.mxu0 %v717
  %719 = vmatprep.subr.mxu0 0.0
  %v720 = vand.u32 %v707, 4294901760
  %721 = vmatpush1.msra.mxu0 %v720
  %722 = vmatprep.subr.mxu0 0.0
  %v723 = vand.u32 %v706, 4294901760
  %724 = vmatpush1.msra.mxu0 %v723
  %725 = vmatprep.subr.mxu0 0.0
  %v726 = vand.u32 %v705, 4294901760
  %727 = vmatpush1.msra.mxu0 %v726
  %728 = vmatprep.subr.mxu0 0.0
  %v729 = vand.u32 %v704, 4294901760
  %730 = vmatpush1.msra.mxu0 %v729
  %731 = vmatprep.subr.mxu0 0.0
  %v732 = vand.u32 %v703, 4294901760
  %733 = vmatpush1.msra.mxu0 %v732
  %734 = vmatprep.subr.mxu0 0.0
  %v735 = vand.u32 %v702, 4294901760
  %736 = vmatpush1.msra.mxu0 %v735
  %737 = vmatprep.subr.mxu0 0.0
  %v738 = vand.u32 %v701, 4294901760
  %739 = vmatpush1.msra.mxu0 %v738
  %740 = vmatprep.subr.mxu0 0.0
  %v741 = vand.u32 %v700, 4294901760
  %742 = vmatpush1.msra.mxu0 %v741
  %743 = vmatprep.subr.mxu0 0.0
  %v744 = vand.u32 %v699, 4294901760
  %745 = vmatpush1.msra.mxu0 %v744
  %746 = vmatprep.subr.mxu0 0.0
  %v747 = vand.u32 %v698, 4294901760
  %748 = vmatpush1.msra.mxu0 %v747
  %749 = vmatprep.subr.mxu0 0.0
  %v750 = vand.u32 %v697, 4294901760
  %751 = vmatpush1.msra.mxu0 %v750
  %752 = vmatprep.subr.mxu0 0.0
  %v753 = vand.u32 %v696, 4294901760
  %754 = vmatpush1.msra.mxu0 %v753
  %755 = vmatprep.subr.mxu0 0.0
  %v756 = vand.u32 %v695, 4294901760
  %757 = vmatpush1.msra.mxu0 %v756
  %758 = vmatprep.subr.mxu0 0.0
  %v759 = vand.u32 %v694, 4294901760
  %760 = vmatpush1.msra.mxu0 %v759
  %761 = vmatprep.subr.mxu0 0.0
  %v762 = vand.u32 %v693, 4294901760
  %763 = vmatpush1.msra.mxu0 %v762
  %764 = vmatprep.subr.mxu0 0.0
  %765 = vmatpush2.msra.mxu0 0.0
  %766 = vmatprep.subr.mxu0 0.0
  %767 = vmatpush2.msra.mxu0 0.0
  %768 = vmatprep.subr.mxu0 0.0
  %769 = vmatpush2.msra.mxu0 0.0
  %770 = vmatprep.subr.mxu0 0.0
  %771 = vmatpush2.msra.mxu0 0.0
  %772 = vmatprep.subr.mxu0 0.0
  %773 = vmatpush2.msra.mxu0 0.0
  %774 = vmatprep.subr.mxu0 0.0
  %775 = vmatpush2.msra.mxu0 0.0
  %776 = vmatprep.subr.mxu0 0.0
  %777 = vmatpush2.msra.mxu0 0.0
  %778 = vmatprep.subr.mxu0 0.0
  %779 = vmatpush2.msra.mxu0 0.0
  %780 = vmatprep.subr.mxu0 0.0
  %781 = vmatpush2.msra.mxu0 0.0
  %782 = vmatprep.subr.mxu0 0.0
  %783 = vmatpush2.msra.mxu0 0.0
  %784 = vmatprep.subr.mxu0 0.0
  %785 = vmatpush2.msra.mxu0 0.0
  %786 = vmatprep.subr.mxu0 0.0
  %787 = vmatpush2.msra.mxu0 0.0
  %788 = vmatprep.subr.mxu0 0.0
  %789 = vmatpush2.msra.mxu0 0.0
  %790 = vmatprep.subr.mxu0 0.0
  %791 = vmatpush2.msra.mxu0 0.0
  %792 = vmatprep.subr.mxu0 0.0
  %793 = vmatpush2.msra.mxu0 0.0
  %794 = vmatprep.subr.mxu0 0.0
  %795 = vmatpush2.msra.mxu0 0.0
  %796 = vmatprep.mubr.f32.mxu0 0.0
  %v797 = vand.u32 %v692, 4294901760
  %v798 = vsub.f32 %v692, %v797
  %v799 = vand.u32 %v798, 4294901760
  %v800 = vsub.f32 %v798, %v799
  %v801 = vand.u32 %v800, 4294901760
  %802 = vmatmul.mubr.f32.gmra.mxu0 %v801
  %v803 = vpop.f32.mrf.mxu0
  %v804 = vadd.f32 %v714, %v803
  %v805 = vpop.f32.mrf.mxu0
  %806 = vdwg.mxu0
  %807 = vmatprep.subr.mxu0 0.0
  %v808 = vand.u32 %v708, 4294901760
  %v809 = vsub.f32 %v708, %v808
  %v810 = vand.u32 %v809, 4294901760
  %v811 = vsub.f32 %v809, %v810
  %v812 = vand.u32 %v811, 4294901760
  %813 = vmatpush1.msra.mxu0 %v812
  %814 = vmatprep.subr.mxu0 0.0
  %v815 = vand.u32 %v707, 4294901760
  %v816 = vsub.f32 %v707, %v815
  %v817 = vand.u32 %v816, 4294901760
  %v818 = vsub.f32 %v816, %v817
  %v819 = vand.u32 %v818, 4294901760
  %820 = vmatpush1.msra.mxu0 %v819
  %821 = vmatprep.subr.mxu0 0.0
  %v822 = vand.u32 %v706, 4294901760
  %v823 = vsub.f32 %v706, %v822
  %v824 = vand.u32 %v823, 4294901760
  %v825 = vsub.f32 %v823, %v824
  %v826 = vand.u32 %v825, 4294901760
  %827 = vmatpush1.msra.mxu0 %v826
  %828 = vmatprep.subr.mxu0 0.0
  %v829 = vand.u32 %v705, 4294901760
  %v830 = vsub.f32 %v705, %v829
  %v831 = vand.u32 %v830, 4294901760
  %v832 = vsub.f32 %v830, %v831
  %v833 = vand.u32 %v832, 4294901760
  %834 = vmatpush1.msra.mxu0 %v833
  %835 = vmatprep.subr.mxu0 0.0
  %v836 = vand.u32 %v704, 4294901760
  %v837 = vsub.f32 %v704, %v836
  %v838 = vand.u32 %v837, 4294901760
  %v839 = vsub.f32 %v837, %v838
  %v840 = vand.u32 %v839, 4294901760
  %841 = vmatpush1.msra.mxu0 %v840
  %842 = vmatprep.subr.mxu0 0.0
  %v843 = vand.u32 %v703, 4294901760
  %v844 = vsub.f32 %v703, %v843
  %v845 = vand.u32 %v844, 4294901760
  %v846 = vsub.f32 %v844, %v845
  %v847 = vand.u32 %v846, 4294901760
  %848 = vmatpush1.msra.mxu0 %v847
  %849 = vmatprep.subr.mxu0 0.0
  %v850 = vand.u32 %v702, 4294901760
  %v851 = vsub.f32 %v702, %v850
  %v852 = vand.u32 %v851, 4294901760
  %v853 = vsub.f32 %v851, %v852
  %v854 = vand.u32 %v853, 4294901760
  %855 = vmatpush1.msra.mxu0 %v854
  %856 = vmatprep.subr.mxu0 0.0
  %v857 = vand.u32 %v701, 4294901760
  %v858 = vsub.f32 %v701, %v857
  %v859 = vand.u32 %v858, 4294901760
  %v860 = vsub.f32 %v858, %v859
  %v861 = vand.u32 %v860, 4294901760
  %862 = vmatpush1.msra.mxu0 %v861
  %863 = vmatprep.subr.mxu0 0.0
  %v864 = vand.u32 %v700, 4294901760
  %v865 = vsub.f32 %v700, %v864
  %v866 = vand.u32 %v865, 4294901760
  %v867 = vsub.f32 %v865, %v866
  %v868 = vand.u32 %v867, 4294901760
  %869 = vmatpush1.msra.mxu0 %v868
  %870 = vmatprep.subr.mxu0 0.0
  %v871 = vand.u32 %v699, 4294901760
  %v872 = vsub.f32 %v699, %v871
  %v873 = vand.u32 %v872, 4294901760
  %v874 = vsub.f32 %v872, %v873
  %v875 = vand.u32 %v874, 4294901760
  %876 = vmatpush1.msra.mxu0 %v875
  %877 = vmatprep.subr.mxu0 0.0
  %v878 = vand.u32 %v698, 4294901760
  %v879 = vsub.f32 %v698, %v878
  %v880 = vand.u32 %v879, 4294901760
  %v881 = vsub.f32 %v879, %v880
  %v882 = vand.u32 %v881, 4294901760
  %883 = vmatpush1.msra.mxu0 %v882
  %884 = vmatprep.subr.mxu0 0.0
  %v885 = vand.u32 %v697, 4294901760
  %v886 = vsub.f32 %v697, %v885
  %v887 = vand.u32 %v886, 4294901760
  %v888 = vsub.f32 %v886, %v887
  %v889 = vand.u32 %v888, 4294901760
  %890 = vmatpush1.msra.mxu0 %v889
  %891 = vmatprep.subr.mxu0 0.0
  %v892 = vand.u32 %v696, 4294901760
  %v893 = vsub.f32 %v696, %v892
  %v894 = vand.u32 %v893, 4294901760
  %v895 = vsub.f32 %v893, %v894
  %v896 = vand.u32 %v895, 4294901760
  %897 = vmatpush1.msra.mxu0 %v896
  %898 = vmatprep.subr.mxu0 0.0
  %v899 = vand.u32 %v695, 4294901760
  %v900 = vsub.f32 %v695, %v899
  %v901 = vand.u32 %v900, 4294901760
  %v902 = vsub.f32 %v900, %v901
  %v903 = vand.u32 %v902, 4294901760
  %904 = vmatpush1.msra.mxu0 %v903
  %905 = vmatprep.subr.mxu0 0.0
  %v906 = vand.u32 %v694, 4294901760
  %v907 = vsub.f32 %v694, %v906
  %v908 = vand.u32 %v907, 4294901760
  %v909 = vsub.f32 %v907, %v908
  %v910 = vand.u32 %v909, 4294901760
  %911 = vmatpush1.msra.mxu0 %v910
  %912 = vmatprep.subr.mxu0 0.0
  %v913 = vand.u32 %v693, 4294901760
  %v914 = vsub.f32 %v693, %v913
  %v915 = vand.u32 %v914, 4294901760
  %v916 = vsub.f32 %v914, %v915
  %v917 = vand.u32 %v916, 4294901760
  %918 = vmatpush1.msra.mxu0 %v917
  %919 = vmatprep.subr.mxu0 0.0
  %920 = vmatpush2.msra.mxu0 0.0
  %921 = vmatprep.subr.mxu0 0.0
  %922 = vmatpush2.msra.mxu0 0.0
  %923 = vmatprep.subr.mxu0 0.0
  %924 = vmatpush2.msra.mxu0 0.0
  %925 = vmatprep.subr.mxu0 0.0
  %926 = vmatpush2.msra.mxu0 0.0
  %927 = vmatprep.subr.mxu0 0.0
  %928 = vmatpush2.msra.mxu0 0.0
  %929 = vmatprep.subr.mxu0 0.0
  %930 = vmatpush2.msra.mxu0 0.0
  %931 = vmatprep.subr.mxu0 0.0
  %932 = vmatpush2.msra.mxu0 0.0
  %933 = vmatprep.subr.mxu0 0.0
  %934 = vmatpush2.msra.mxu0 0.0
  %935 = vmatprep.subr.mxu0 0.0
  %936 = vmatpush2.msra.mxu0 0.0
  %937 = vmatprep.subr.mxu0 0.0
  %938 = vmatpush2.msra.mxu0 0.0
  %939 = vmatprep.subr.mxu0 0.0
  %940 = vmatpush2.msra.mxu0 0.0
  %941 = vmatprep.subr.mxu0 0.0
  %942 = vmatpush2.msra.mxu0 0.0
  %943 = vmatprep.subr.mxu0 0.0
  %944 = vmatpush2.msra.mxu0 0.0
  %945 = vmatprep.subr.mxu0 0.0
  %946 = vmatpush2.msra.mxu0 0.0
  %947 = vmatprep.subr.mxu0 0.0
  %948 = vmatpush2.msra.mxu0 0.0
  %949 = vmatprep.subr.mxu0 0.0
  %950 = vmatpush2.msra.mxu0 0.0
  %951 = vmatprep.mubr.f32.mxu0 0.0
  %v952 = vand.u32 %v692, 4294901760
  %953 = vmatmul.mubr.f32.gmra.mxu0 %v952
  %v954 = vpop.f32.mrf.mxu0
  %v955 = vadd.f32 %v804, %v954
  %v956 = vpop.f32.mrf.mxu0
  %957 = vdwg.mxu0
  %958 = vmatprep.subr.mxu0 0.0
  %v959 = vand.u32 %v708, 4294901760
  %v960 = vsub.f32 %v708, %v959
  %961 = vmatpush1.msra.mxu0 %v960
  %962 = vmatprep.subr.mxu0 0.0
  %v963 = vand.u32 %v707, 4294901760
  %v964 = vsub.f32 %v707, %v963
  %965 = vmatpush1.msra.mxu0 %v964
  %966 = vmatprep.subr.mxu0 0.0
  %v967 = vand.u32 %v706, 4294901760
  %v968 = vsub.f32 %v706, %v967
  %969 = vmatpush1.msra.mxu0 %v968
  %970 = vmatprep.subr.mxu0 0.0
  %v971 = vand.u32 %v705, 4294901760
  %v972 = vsub.f32 %v705, %v971
  %973 = vmatpush1.msra.mxu0 %v972
  %974 = vmatprep.subr.mxu0 0.0
  %v975 = vand.u32 %v704, 4294901760
  %v976 = vsub.f32 %v704, %v975
  %977 = vmatpush1.msra.mxu0 %v976
  %978 = vmatprep.subr.mxu0 0.0
  %v979 = vand.u32 %v703, 4294901760
  %v980 = vsub.f32 %v703, %v979
  %981 = vmatpush1.msra.mxu0 %v980
  %982 = vmatprep.subr.mxu0 0.0
  %v983 = vand.u32 %v702, 4294901760
  %v984 = vsub.f32 %v702, %v983
  %985 = vmatpush1.msra.mxu0 %v984
  %986 = vmatprep.subr.mxu0 0.0
  %v987 = vand.u32 %v701, 4294901760
  %v988 = vsub.f32 %v701, %v987
  %989 = vmatpush1.msra.mxu0 %v988
  %990 = vmatprep.subr.mxu0 0.0
  %v991 = vand.u32 %v700, 4294901760
  %v992 = vsub.f32 %v700, %v991
  %993 = vmatpush1.msra.mxu0 %v992
  %994 = vmatprep.subr.mxu0 0.0
  %v995 = vand.u32 %v699, 4294901760
  %v996 = vsub.f32 %v699, %v995
  %997 = vmatpush1.msra.mxu0 %v996
  %998 = vmatprep.subr.mxu0 0.0
  %v999 = vand.u32 %v698, 4294901760
  %v1000 = vsub.f32 %v698, %v999
  %1001 = vmatpush1.msra.mxu0 %v1000
  %1002 = vmatprep.subr.mxu0 0.0
  %v1003 = vand.u32 %v697, 4294901760
  %v1004 = vsub.f32 %v697, %v1003
  %1005 = vmatpush1.msra.mxu0 %v1004
  %1006 = vmatprep.subr.mxu0 0.0
  %v1007 = vand.u32 %v696, 4294901760
  %v1008 = vsub.f32 %v696, %v1007
  %1009 = vmatpush1.msra.mxu0 %v1008
  %1010 = vmatprep.subr.mxu0 0.0
  %v1011 = vand.u32 %v695, 4294901760
  %v1012 = vsub.f32 %v695, %v1011
  %1013 = vmatpush1.msra.mxu0 %v1012
  %1014 = vmatprep.subr.mxu0 0.0
  %v1015 = vand.u32 %v694, 4294901760
  %v1016 = vsub.f32 %v694, %v1015
  %1017 = vmatpush1.msra.mxu0 %v1016
  %1018 = vmatprep.subr.mxu0 0.0
  %v1019 = vand.u32 %v693, 4294901760
  %v1020 = vsub.f32 %v693, %v1019
  %1021 = vmatpush1.msra.mxu0 %v1020
  %1022 = vmatprep.subr.mxu0 0.0
  %1023 = vmatpush2.msra.mxu0 0.0
  %1024 = vmatprep.subr.mxu0 0.0
  %1025 = vmatpush2.msra.mxu0 0.0
  %1026 = vmatprep.subr.mxu0 0.0
  %1027 = vmatpush2.msra.mxu0 0.0
  %1028 = vmatprep.subr.mxu0 0.0
  %1029 = vmatpush2.msra.mxu0 0.0
  %1030 = vmatprep.subr.mxu0 0.0
  %1031 = vmatpush2.msra.mxu0 0.0
  %1032 = vmatprep.subr.mxu0 0.0
  %1033 = vmatpush2.msra.mxu0 0.0
  %1034 = vmatprep.subr.mxu0 0.0
  %1035 = vmatpush2.msra.mxu0 0.0
  %1036 = vmatprep.subr.mxu0 0.0
  %1037 = vmatpush2.msra.mxu0 0.0
  %1038 = vmatprep.subr.mxu0 0.0
  %1039 = vmatpush2.msra.mxu0 0.0
  %1040 = vmatprep.subr.mxu0 0.0
  %1041 = vmatpush2.msra.mxu0 0.0
  %1042 = vmatprep.subr.mxu0 0.0
  %1043 = vmatpush2.msra.mxu0 0.0
  %1044 = vmatprep.subr.mxu0 0.0
  %1045 = vmatpush2.msra.mxu0 0.0
  %1046 = vmatprep.subr.mxu0 0.0
  %1047 = vmatpush2.msra.mxu0 0.0
  %1048 = vmatprep.subr.mxu0 0.0
  %1049 = vmatpush2.msra.mxu0 0.0
  %1050 = vmatprep.subr.mxu0 0.0
  %1051 = vmatpush2.msra.mxu0 0.0
  %1052 = vmatprep.subr.mxu0 0.0
  %1053 = vmatpush2.msra.mxu0 0.0
  %1054 = vmatprep.mubr.f32.mxu0 0.0
  %v1055 = vand.u32 %v692, 4294901760
  %v1056 = vsub.f32 %v692, %v1055
  %1057 = vmatmul.mubr.f32.gmra.mxu0 %v1056
  %v1058 = vpop.f32.mrf.mxu0
  %v1059 = vadd.f32 %v955, %v1058
  %v1060 = vpop.f32.mrf.mxu0
  %1061 = vdwg.mxu0
  %1062 = vmatprep.subr.mxu0 0.0
  %v1063 = vand.u32 %v708, 4294901760
  %1064 = vmatpush1.msra.mxu0 %v1063
  %1065 = vmatprep.subr.mxu0 0.0
  %v1066 = vand.u32 %v707, 4294901760
  %1067 = vmatpush1.msra.mxu0 %v1066
  %1068 = vmatprep.subr.mxu0 0.0
  %v1069 = vand.u32 %v706, 4294901760
  %1070 = vmatpush1.msra.mxu0 %v1069
  %1071 = vmatprep.subr.mxu0 0.0
  %v1072 = vand.u32 %v705, 4294901760
  %1073 = vmatpush1.msra.mxu0 %v1072
  %1074 = vmatprep.subr.mxu0 0.0
  %v1075 = vand.u32 %v704, 4294901760
  %1076 = vmatpush1.msra.mxu0 %v1075
  %1077 = vmatprep.subr.mxu0 0.0
  %v1078 = vand.u32 %v703, 4294901760
  %1079 = vmatpush1.msra.mxu0 %v1078
  %1080 = vmatprep.subr.mxu0 0.0
  %v1081 = vand.u32 %v702, 4294901760
  %1082 = vmatpush1.msra.mxu0 %v1081
  %1083 = vmatprep.subr.mxu0 0.0
  %v1084 = vand.u32 %v701, 4294901760
  %1085 = vmatpush1.msra.mxu0 %v1084
  %1086 = vmatprep.subr.mxu0 0.0
  %v1087 = vand.u32 %v700, 4294901760
  %1088 = vmatpush1.msra.mxu0 %v1087
  %1089 = vmatprep.subr.mxu0 0.0
  %v1090 = vand.u32 %v699, 4294901760
  %1091 = vmatpush1.msra.mxu0 %v1090
  %1092 = vmatprep.subr.mxu0 0.0
  %v1093 = vand.u32 %v698, 4294901760
  %1094 = vmatpush1.msra.mxu0 %v1093
  %1095 = vmatprep.subr.mxu0 0.0
  %v1096 = vand.u32 %v697, 4294901760
  %1097 = vmatpush1.msra.mxu0 %v1096
  %1098 = vmatprep.subr.mxu0 0.0
  %v1099 = vand.u32 %v696, 4294901760
  %1100 = vmatpush1.msra.mxu0 %v1099
  %1101 = vmatprep.subr.mxu0 0.0
  %v1102 = vand.u32 %v695, 4294901760
  %1103 = vmatpush1.msra.mxu0 %v1102
  %1104 = vmatprep.subr.mxu0 0.0
  %v1105 = vand.u32 %v694, 4294901760
  %1106 = vmatpush1.msra.mxu0 %v1105
  %1107 = vmatprep.subr.mxu0 0.0
  %v1108 = vand.u32 %v693, 4294901760
  %1109 = vmatpush1.msra.mxu0 %v1108
  %1110 = vmatprep.subr.mxu0 0.0
  %1111 = vmatpush2.msra.mxu0 0.0
  %1112 = vmatprep.subr.mxu0 0.0
  %1113 = vmatpush2.msra.mxu0 0.0
  %1114 = vmatprep.subr.mxu0 0.0
  %1115 = vmatpush2.msra.mxu0 0.0
  %1116 = vmatprep.subr.mxu0 0.0
  %1117 = vmatpush2.msra.mxu0 0.0
  %1118 = vmatprep.subr.mxu0 0.0
  %1119 = vmatpush2.msra.mxu0 0.0
  %1120 = vmatprep.subr.mxu0 0.0
  %1121 = vmatpush2.msra.mxu0 0.0
  %1122 = vmatprep.subr.mxu0 0.0
  %1123 = vmatpush2.msra.mxu0 0.0
  %1124 = vmatprep.subr.mxu0 0.0
  %1125 = vmatpush2.msra.mxu0 0.0
  %1126 = vmatprep.subr.mxu0 0.0
  %1127 = vmatpush2.msra.mxu0 0.0
  %1128 = vmatprep.subr.mxu0 0.0
  %1129 = vmatpush2.msra.mxu0 0.0
  %1130 = vmatprep.subr.mxu0 0.0
  %1131 = vmatpush2.msra.mxu0 0.0
  %1132 = vmatprep.subr.mxu0 0.0
  %1133 = vmatpush2.msra.mxu0 0.0
  %1134 = vmatprep.subr.mxu0 0.0
  %1135 = vmatpush2.msra.mxu0 0.0
  %1136 = vmatprep.subr.mxu0 0.0
  %1137 = vmatpush2.msra.mxu0 0.0
  %1138 = vmatprep.subr.mxu0 0.0
  %1139 = vmatpush2.msra.mxu0 0.0
  %1140 = vmatprep.subr.mxu0 0.0
  %1141 = vmatpush2.msra.mxu0 0.0
  %1142 = vmatprep.mubr.f32.mxu0 0.0
  %v1143 = vand.u32 %v692, 4294901760
  %v1144 = vsub.f32 %v692, %v1143
  %v1145 = vand.u32 %v1144, 4294901760
  %1146 = vmatmul.mubr.f32.gmra.mxu0 %v1145
  %v1147 = vpop.f32.mrf.mxu0
  %v1148 = vadd.f32 %v1059, %v1147
  %v1149 = vpop.f32.mrf.mxu0
  %1150 = vdwg.mxu0
  %1151 = vmatprep.subr.mxu0 0.0
  %v1152 = vand.u32 %v708, 4294901760
  %v1153 = vsub.f32 %v708, %v1152
  %v1154 = vand.u32 %v1153, 4294901760
  %1155 = vmatpush1.msra.mxu0 %v1154
  %1156 = vmatprep.subr.mxu0 0.0
  %v1157 = vand.u32 %v707, 4294901760
  %v1158 = vsub.f32 %v707, %v1157
  %v1159 = vand.u32 %v1158, 4294901760
  %1160 = vmatpush1.msra.mxu0 %v1159
  %1161 = vmatprep.subr.mxu0 0.0
  %v1162 = vand.u32 %v706, 4294901760
  %v1163 = vsub.f32 %v706, %v1162
  %v1164 = vand.u32 %v1163, 4294901760
  %1165 = vmatpush1.msra.mxu0 %v1164
  %1166 = vmatprep.subr.mxu0 0.0
  %v1167 = vand.u32 %v705, 4294901760
  %v1168 = vsub.f32 %v705, %v1167
  %v1169 = vand.u32 %v1168, 4294901760
  %1170 = vmatpush1.msra.mxu0 %v1169
  %1171 = vmatprep.subr.mxu0 0.0
  %v1172 = vand.u32 %v704, 4294901760
  %v1173 = vsub.f32 %v704, %v1172
  %v1174 = vand.u32 %v1173, 4294901760
  %1175 = vmatpush1.msra.mxu0 %v1174
  %1176 = vmatprep.subr.mxu0 0.0
  %v1177 = vand.u32 %v703, 4294901760
  %v1178 = vsub.f32 %v703, %v1177
  %v1179 = vand.u32 %v1178, 4294901760
  %1180 = vmatpush1.msra.mxu0 %v1179
  %1181 = vmatprep.subr.mxu0 0.0
  %v1182 = vand.u32 %v702, 4294901760
  %v1183 = vsub.f32 %v702, %v1182
  %v1184 = vand.u32 %v1183, 4294901760
  %1185 = vmatpush1.msra.mxu0 %v1184
  %1186 = vmatprep.subr.mxu0 0.0
  %v1187 = vand.u32 %v701, 4294901760
  %v1188 = vsub.f32 %v701, %v1187
  %v1189 = vand.u32 %v1188, 4294901760
  %1190 = vmatpush1.msra.mxu0 %v1189
  %1191 = vmatprep.subr.mxu0 0.0
  %v1192 = vand.u32 %v700, 4294901760
  %v1193 = vsub.f32 %v700, %v1192
  %v1194 = vand.u32 %v1193, 4294901760
  %1195 = vmatpush1.msra.mxu0 %v1194
  %1196 = vmatprep.subr.mxu0 0.0
  %v1197 = vand.u32 %v699, 4294901760
  %v1198 = vsub.f32 %v699, %v1197
  %v1199 = vand.u32 %v1198, 4294901760
  %1200 = vmatpush1.msra.mxu0 %v1199
  %1201 = vmatprep.subr.mxu0 0.0
  %v1202 = vand.u32 %v698, 4294901760
  %v1203 = vsub.f32 %v698, %v1202
  %v1204 = vand.u32 %v1203, 4294901760
  %1205 = vmatpush1.msra.mxu0 %v1204
  %1206 = vmatprep.subr.mxu0 0.0
  %v1207 = vand.u32 %v697, 4294901760
  %v1208 = vsub.f32 %v697, %v1207
  %v1209 = vand.u32 %v1208, 4294901760
  %1210 = vmatpush1.msra.mxu0 %v1209
  %1211 = vmatprep.subr.mxu0 0.0
  %v1212 = vand.u32 %v696, 4294901760
  %v1213 = vsub.f32 %v696, %v1212
  %v1214 = vand.u32 %v1213, 4294901760
  %1215 = vmatpush1.msra.mxu0 %v1214
  %1216 = vmatprep.subr.mxu0 0.0
  %v1217 = vand.u32 %v695, 4294901760
  %v1218 = vsub.f32 %v695, %v1217
  %v1219 = vand.u32 %v1218, 4294901760
  %1220 = vmatpush1.msra.mxu0 %v1219
  %1221 = vmatprep.subr.mxu0 0.0
  %v1222 = vand.u32 %v694, 4294901760
  %v1223 = vsub.f32 %v694, %v1222
  %v1224 = vand.u32 %v1223, 4294901760
  %1225 = vmatpush1.msra.mxu0 %v1224
  %1226 = vmatprep.subr.mxu0 0.0
  %v1227 = vand.u32 %v693, 4294901760
  %v1228 = vsub.f32 %v693, %v1227
  %v1229 = vand.u32 %v1228, 4294901760
  %1230 = vmatpush1.msra.mxu0 %v1229
  %1231 = vmatprep.subr.mxu0 0.0
  %1232 = vmatpush2.msra.mxu0 0.0
  %1233 = vmatprep.subr.mxu0 0.0
  %1234 = vmatpush2.msra.mxu0 0.0
  %1235 = vmatprep.subr.mxu0 0.0
  %1236 = vmatpush2.msra.mxu0 0.0
  %1237 = vmatprep.subr.mxu0 0.0
  %1238 = vmatpush2.msra.mxu0 0.0
  %1239 = vmatprep.subr.mxu0 0.0
  %1240 = vmatpush2.msra.mxu0 0.0
  %1241 = vmatprep.subr.mxu0 0.0
  %1242 = vmatpush2.msra.mxu0 0.0
  %1243 = vmatprep.subr.mxu0 0.0
  %1244 = vmatpush2.msra.mxu0 0.0
  %1245 = vmatprep.subr.mxu0 0.0
  %1246 = vmatpush2.msra.mxu0 0.0
  %1247 = vmatprep.subr.mxu0 0.0
  %1248 = vmatpush2.msra.mxu0 0.0
  %1249 = vmatprep.subr.mxu0 0.0
  %1250 = vmatpush2.msra.mxu0 0.0
  %1251 = vmatprep.subr.mxu0 0.0
  %1252 = vmatpush2.msra.mxu0 0.0
  %1253 = vmatprep.subr.mxu0 0.0
  %1254 = vmatpush2.msra.mxu0 0.0
  %1255 = vmatprep.subr.mxu0 0.0
  %1256 = vmatpush2.msra.mxu0 0.0
  %1257 = vmatprep.subr.mxu0 0.0
  %1258 = vmatpush2.msra.mxu0 0.0
  %1259 = vmatprep.subr.mxu0 0.0
  %1260 = vmatpush2.msra.mxu0 0.0
  %1261 = vmatprep.subr.mxu0 0.0
  %1262 = vmatpush2.msra.mxu0 0.0
  %1263 = vmatprep.mubr.f32.mxu0 0.0
  %v1264 = vand.u32 %v692, 4294901760
  %1265 = vmatmul.mubr.f32.gmra.mxu0 %v1264
  %v1266 = vpop.f32.mrf.mxu0
  %v1267 = vadd.f32 %v1148, %v1266
  %v1268 = vpop.f32.mrf.mxu0
  %1269 = vdwg.mxu0
  %1270 = vmatprep.subr.mxu0 0.0
  %v1271 = vand.u32 %v708, 4294901760
  %1272 = vmatpush1.msra.mxu0 %v1271
  %1273 = vmatprep.subr.mxu0 0.0
  %v1274 = vand.u32 %v707, 4294901760
  %1275 = vmatpush1.msra.mxu0 %v1274
  %1276 = vmatprep.subr.mxu0 0.0
  %v1277 = vand.u32 %v706, 4294901760
  %1278 = vmatpush1.msra.mxu0 %v1277
  %1279 = vmatprep.subr.mxu0 0.0
  %v1280 = vand.u32 %v705, 4294901760
  %1281 = vmatpush1.msra.mxu0 %v1280
  %1282 = vmatprep.subr.mxu0 0.0
  %v1283 = vand.u32 %v704, 4294901760
  %1284 = vmatpush1.msra.mxu0 %v1283
  %1285 = vmatprep.subr.mxu0 0.0
  %v1286 = vand.u32 %v703, 4294901760
  %1287 = vmatpush1.msra.mxu0 %v1286
  %1288 = vmatprep.subr.mxu0 0.0
  %v1289 = vand.u32 %v702, 4294901760
  %1290 = vmatpush1.msra.mxu0 %v1289
  %1291 = vmatprep.subr.mxu0 0.0
  %v1292 = vand.u32 %v701, 4294901760
  %1293 = vmatpush1.msra.mxu0 %v1292
  %1294 = vmatprep.subr.mxu0 0.0
  %v1295 = vand.u32 %v700, 4294901760
  %1296 = vmatpush1.msra.mxu0 %v1295
  %1297 = vmatprep.subr.mxu0 0.0
  %v1298 = vand.u32 %v699, 4294901760
  %1299 = vmatpush1.msra.mxu0 %v1298
  %1300 = vmatprep.subr.mxu0 0.0
  %v1301 = vand.u32 %v698, 4294901760
  %1302 = vmatpush1.msra.mxu0 %v1301
  %1303 = vmatprep.subr.mxu0 0.0
  %v1304 = vand.u32 %v697, 4294901760
  %1305 = vmatpush1.msra.mxu0 %v1304
  %1306 = vmatprep.subr.mxu0 0.0
  %v1307 = vand.u32 %v696, 4294901760
  %1308 = vmatpush1.msra.mxu0 %v1307
  %1309 = vmatprep.subr.mxu0 0.0
  %v1310 = vand.u32 %v695, 4294901760
  %1311 = vmatpush1.msra.mxu0 %v1310
  %1312 = vmatprep.subr.mxu0 0.0
  %v1313 = vand.u32 %v694, 4294901760
  %1314 = vmatpush1.msra.mxu0 %v1313
  %1315 = vmatprep.subr.mxu0 0.0
  %v1316 = vand.u32 %v693, 4294901760
  %1317 = vmatpush1.msra.mxu0 %v1316
  %1318 = vmatprep.subr.mxu0 0.0
  %1319 = vmatpush2.msra.mxu0 0.0
  %1320 = vmatprep.subr.mxu0 0.0
  %1321 = vmatpush2.msra.mxu0 0.0
  %1322 = vmatprep.subr.mxu0 0.0
  %1323 = vmatpush2.msra.mxu0 0.0
  %1324 = vmatprep.subr.mxu0 0.0
  %1325 = vmatpush2.msra.mxu0 0.0
  %1326 = vmatprep.subr.mxu0 0.0
  %1327 = vmatpush2.msra.mxu0 0.0
  %1328 = vmatprep.subr.mxu0 0.0
  %1329 = vmatpush2.msra.mxu0 0.0
  %1330 = vmatprep.subr.mxu0 0.0
  %1331 = vmatpush2.msra.mxu0 0.0
  %1332 = vmatprep.subr.mxu0 0.0
  %1333 = vmatpush2.msra.mxu0 0.0
  %1334 = vmatprep.subr.mxu0 0.0
  %1335 = vmatpush2.msra.mxu0 0.0
  %1336 = vmatprep.subr.mxu0 0.0
  %1337 = vmatpush2.msra.mxu0 0.0
  %1338 = vmatprep.subr.mxu0 0.0
  %1339 = vmatpush2.msra.mxu0 0.0
  %1340 = vmatprep.subr.mxu0 0.0
  %1341 = vmatpush2.msra.mxu0 0.0
  %1342 = vmatprep.subr.mxu0 0.0
  %1343 = vmatpush2.msra.mxu0 0.0
  %1344 = vmatprep.subr.mxu0 0.0
  %1345 = vmatpush2.msra.mxu0 0.0
  %1346 = vmatprep.subr.mxu0 0.0
  %1347 = vmatpush2.msra.mxu0 0.0
  %1348 = vmatprep.subr.mxu0 0.0
  %1349 = vmatpush2.msra.mxu0 0.0
  %1350 = vmatprep.mubr.f32.mxu0 0.0
  %v1351 = vand.u32 %v692, 4294901760
  %1352 = vmatmul.mubr.f32.gmra.mxu0 %v1351
  %v1353 = vpop.f32.mrf.mxu0
  %v1354 = vadd.f32 %v1267, %v1353
  %v1355 = vpop.f32.mrf.mxu0
  %1356 = vdwg.mxu0
  %v1357 = vadd.f32 %v1354, %v692
  %v1358 = vmax.f32 %v1357, 0.0
  %v1359 = vld [vmem:[%s5] sm:$0xff]
  %v1360 = vld [vmem:[%s5 + $0x8] sm:$0xff]
  %v1361 = vld [vmem:[%s5 + $0x10] sm:$0xff]
  %v1362 = vld [vmem:[%s5 + $0x18] sm:$0xff]
  %v1363 = vld [vmem:[%s5 + $0x20] sm:$0xff]
  %v1364 = vld [vmem:[%s5 + $0x28] sm:$0xff]
  %v1365 = vld [vmem:[%s5 + $0x30] sm:$0xff]
  %v1366 = vld [vmem:[%s5 + $0x38] sm:$0xff]
  %v1367 = vld [vmem:[%s5 + $0x40] sm:$0xff]
  %v1368 = vld [vmem:[%s5 + $0x48] sm:$0xff]
  %v1369 = vld [vmem:[%s5 + $0x50] sm:$0xff]
  %v1370 = vld [vmem:[%s5 + $0x58] sm:$0xff]
  %v1371 = vld [vmem:[%s5 + $0x60] sm:$0xff]
  %v1372 = vld [vmem:[%s5 + $0x68] sm:$0xff]
  %v1373 = vld [vmem:[%s5 + $0x70] sm:$0xff]
  %v1374 = vld [vmem:[%s5 + $0x78] sm:$0xff]
  %v1375 = vld [vmem:[%s6] sm:$0x1]
  %v1377 = vlaneseq
  %v1378 = vshrl.u32 %v1377, 7
  %v1379 = vsub.s32 0, %v1378
  %v1380 = vrot.slane %v1375, %v1379
  %1382 = vmatprep.subr.mxu0 0.0
  %v1383 = vand.u32 %v1374, 4294901760
  %1384 = vmatpush1.msra.mxu0 %v1383
  %1385 = vmatprep.subr.mxu0 0.0
  %v1386 = vand.u32 %v1373, 4294901760
  %1387 = vmatpush1.msra.mxu0 %v1386
  %1388 = vmatprep.subr.mxu0 0.0
  %v1389 = vand.u32 %v1372, 4294901760
  %1390 = vmatpush1.msra.mxu0 %v1389
  %1391 = vmatprep.subr.mxu0 0.0
  %v1392 = vand.u32 %v1371, 4294901760
  %1393 = vmatpush1.msra.mxu0 %v1392
  %1394 = vmatprep.subr.mxu0 0.0
  %v1395 = vand.u32 %v1370, 4294901760
  %1396 = vmatpush1.msra.mxu0 %v1395
  %1397 = vmatprep.subr.mxu0 0.0
  %v1398 = vand.u32 %v1369, 4294901760
  %1399 = vmatpush1.msra.mxu0 %v1398
  %1400 = vmatprep.subr.mxu0 0.0
  %v1401 = vand.u32 %v1368, 4294901760
  %1402 = vmatpush1.msra.mxu0 %v1401
  %1403 = vmatprep.subr.mxu0 0.0
  %v1404 = vand.u32 %v1367, 4294901760
  %1405 = vmatpush1.msra.mxu0 %v1404
  %1406 = vmatprep.subr.mxu0 0.0
  %v1407 = vand.u32 %v1366, 4294901760
  %1408 = vmatpush1.msra.mxu0 %v1407
  %1409 = vmatprep.subr.mxu0 0.0
  %v1410 = vand.u32 %v1365, 4294901760
  %1411 = vmatpush1.msra.mxu0 %v1410
  %1412 = vmatprep.subr.mxu0 0.0
  %v1413 = vand.u32 %v1364, 4294901760
  %1414 = vmatpush1.msra.mxu0 %v1413
  %1415 = vmatprep.subr.mxu0 0.0
  %v1416 = vand.u32 %v1363, 4294901760
  %1417 = vmatpush1.msra.mxu0 %v1416
  %1418 = vmatprep.subr.mxu0 0.0
  %v1419 = vand.u32 %v1362, 4294901760
  %1420 = vmatpush1.msra.mxu0 %v1419
  %1421 = vmatprep.subr.mxu0 0.0
  %v1422 = vand.u32 %v1361, 4294901760
  %1423 = vmatpush1.msra.mxu0 %v1422
  %1424 = vmatprep.subr.mxu0 0.0
  %v1425 = vand.u32 %v1360, 4294901760
  %1426 = vmatpush1.msra.mxu0 %v1425
  %1427 = vmatprep.subr.mxu0 0.0
  %v1428 = vand.u32 %v1359, 4294901760
  %1429 = vmatpush1.msra.mxu0 %v1428
  %1430 = vmatprep.subr.mxu0 0.0
  %1431 = vmatpush2.msra.mxu0 0.0
  %1432 = vmatprep.subr.mxu0 0.0
  %1433 = vmatpush2.msra.mxu0 0.0
  %1434 = vmatprep.subr.mxu0 0.0
  %1435 = vmatpush2.msra.mxu0 0.0
  %1436 = vmatprep.subr.mxu0 0.0
  %1437 = vmatpush2.msra.mxu0 0.0
  %1438 = vmatprep.subr.mxu0 0.0
  %1439 = vmatpush2.msra.mxu0 0.0
  %1440 = vmatprep.subr.mxu0 0.0
  %1441 = vmatpush2.msra.mxu0 0.0
  %1442 = vmatprep.subr.mxu0 0.0
  %1443 = vmatpush2.msra.mxu0 0.0
  %1444 = vmatprep.subr.mxu0 0.0
  %1445 = vmatpush2.msra.mxu0 0.0
  %1446 = vmatprep.subr.mxu0 0.0
  %1447 = vmatpush2.msra.mxu0 0.0
  %1448 = vmatprep.subr.mxu0 0.0
  %1449 = vmatpush2.msra.mxu0 0.0
  %1450 = vmatprep.subr.mxu0 0.0
  %1451 = vmatpush2.msra.mxu0 0.0
  %1452 = vmatprep.subr.mxu0 0.0
  %1453 = vmatpush2.msra.mxu0 0.0
  %1454 = vmatprep.subr.mxu0 0.0
  %1455 = vmatpush2.msra.mxu0 0.0
  %1456 = vmatprep.subr.mxu0 0.0
  %1457 = vmatpush2.msra.mxu0 0.0
  %1458 = vmatprep.subr.mxu0 0.0
  %1459 = vmatpush2.msra.mxu0 0.0
  %1460 = vmatprep.subr.mxu0 0.0
  %1461 = vmatpush2.msra.mxu0 0.0
  %1462 = vmatprep.mubr.f32.mxu0 0.0
  %v1463 = vand.u32 %v1358, 4294901760
  %v1464 = vsub.f32 %v1358, %v1463
  %v1465 = vand.u32 %v1464, 4294901760
  %v1466 = vsub.f32 %v1464, %v1465
  %v1467 = vand.u32 %v1466, 4294901760
  %1468 = vmatmul.mubr.f32.gmra.mxu0 %v1467
  %v1469 = vpop.f32.mrf.mxu0
  %v1470 = vadd.f32 %v1380, %v1469
  %v1471 = vpop.f32.mrf.mxu0
  %1472 = vdwg.mxu0
  %1473 = vmatprep.subr.mxu0 0.0
  %v1474 = vand.u32 %v1374, 4294901760
  %v1475 = vsub.f32 %v1374, %v1474
  %v1476 = vand.u32 %v1475, 4294901760
  %v1477 = vsub.f32 %v1475, %v1476
  %v1478 = vand.u32 %v1477, 4294901760
  %1479 = vmatpush1.msra.mxu0 %v1478
  %1480 = vmatprep.subr.mxu0 0.0
  %v1481 = vand.u32 %v1373, 4294901760
  %v1482 = vsub.f32 %v1373, %v1481
  %v1483 = vand.u32 %v1482, 4294901760
  %v1484 = vsub.f32 %v1482, %v1483
  %v1485 = vand.u32 %v1484, 4294901760
  %1486 = vmatpush1.msra.mxu0 %v1485
  %1487 = vmatprep.subr.mxu0 0.0
  %v1488 = vand.u32 %v1372, 4294901760
  %v1489 = vsub.f32 %v1372, %v1488
  %v1490 = vand.u32 %v1489, 4294901760
  %v1491 = vsub.f32 %v1489, %v1490
  %v1492 = vand.u32 %v1491, 4294901760
  %1493 = vmatpush1.msra.mxu0 %v1492
  %1494 = vmatprep.subr.mxu0 0.0
  %v1495 = vand.u32 %v1371, 4294901760
  %v1496 = vsub.f32 %v1371, %v1495
  %v1497 = vand.u32 %v1496, 4294901760
  %v1498 = vsub.f32 %v1496, %v1497
  %v1499 = vand.u32 %v1498, 4294901760
  %1500 = vmatpush1.msra.mxu0 %v1499
  %1501 = vmatprep.subr.mxu0 0.0
  %v1502 = vand.u32 %v1370, 4294901760
  %v1503 = vsub.f32 %v1370, %v1502
  %v1504 = vand.u32 %v1503, 4294901760
  %v1505 = vsub.f32 %v1503, %v1504
  %v1506 = vand.u32 %v1505, 4294901760
  %1507 = vmatpush1.msra.mxu0 %v1506
  %1508 = vmatprep.subr.mxu0 0.0
  %v1509 = vand.u32 %v1369, 4294901760
  %v1510 = vsub.f32 %v1369, %v1509
  %v1511 = vand.u32 %v1510, 4294901760
  %v1512 = vsub.f32 %v1510, %v1511
  %v1513 = vand.u32 %v1512, 4294901760
  %1514 = vmatpush1.msra.mxu0 %v1513
  %1515 = vmatprep.subr.mxu0 0.0
  %v1516 = vand.u32 %v1368, 4294901760
  %v1517 = vsub.f32 %v1368, %v1516
  %v1518 = vand.u32 %v1517, 4294901760
  %v1519 = vsub.f32 %v1517, %v1518
  %v1520 = vand.u32 %v1519, 4294901760
  %1521 = vmatpush1.msra.mxu0 %v1520
  %1522 = vmatprep.subr.mxu0 0.0
  %v1523 = vand.u32 %v1367, 4294901760
  %v1524 = vsub.f32 %v1367, %v1523
  %v1525 = vand.u32 %v1524, 4294901760
  %v1526 = vsub.f32 %v1524, %v1525
  %v1527 = vand.u32 %v1526, 4294901760
  %1528 = vmatpush1.msra.mxu0 %v1527
  %1529 = vmatprep.subr.mxu0 0.0
  %v1530 = vand.u32 %v1366, 4294901760
  %v1531 = vsub.f32 %v1366, %v1530
  %v1532 = vand.u32 %v1531, 4294901760
  %v1533 = vsub.f32 %v1531, %v1532
  %v1534 = vand.u32 %v1533, 4294901760
  %1535 = vmatpush1.msra.mxu0 %v1534
  %1536 = vmatprep.subr.mxu0 0.0
  %v1537 = vand.u32 %v1365, 4294901760
  %v1538 = vsub.f32 %v1365, %v1537
  %v1539 = vand.u32 %v1538, 4294901760
  %v1540 = vsub.f32 %v1538, %v1539
  %v1541 = vand.u32 %v1540, 4294901760
  %1542 = vmatpush1.msra.mxu0 %v1541
  %1543 = vmatprep.subr.mxu0 0.0
  %v1544 = vand.u32 %v1364, 4294901760
  %v1545 = vsub.f32 %v1364, %v1544
  %v1546 = vand.u32 %v1545, 4294901760
  %v1547 = vsub.f32 %v1545, %v1546
  %v1548 = vand.u32 %v1547, 4294901760
  %1549 = vmatpush1.msra.mxu0 %v1548
  %1550 = vmatprep.subr.mxu0 0.0
  %v1551 = vand.u32 %v1363, 4294901760
  %v1552 = vsub.f32 %v1363, %v1551
  %v1553 = vand.u32 %v1552, 4294901760
  %v1554 = vsub.f32 %v1552, %v1553
  %v1555 = vand.u32 %v1554, 4294901760
  %1556 = vmatpush1.msra.mxu0 %v1555
  %1557 = vmatprep.subr.mxu0 0.0
  %v1558 = vand.u32 %v1362, 4294901760
  %v1559 = vsub.f32 %v1362, %v1558
  %v1560 = vand.u32 %v1559, 4294901760
  %v1561 = vsub.f32 %v1559, %v1560
  %v1562 = vand.u32 %v1561, 4294901760
  %1563 = vmatpush1.msra.mxu0 %v1562
  %1564 = vmatprep.subr.mxu0 0.0
  %v1565 = vand.u32 %v1361, 4294901760
  %v1566 = vsub.f32 %v1361, %v1565
  %v1567 = vand.u32 %v1566, 4294901760
  %v1568 = vsub.f32 %v1566, %v1567
  %v1569 = vand.u32 %v1568, 4294901760
  %1570 = vmatpush1.msra.mxu0 %v1569
  %1571 = vmatprep.subr.mxu0 0.0
  %v1572 = vand.u32 %v1360, 4294901760
  %v1573 = vsub.f32 %v1360, %v1572
  %v1574 = vand.u32 %v1573, 4294901760
  %v1575 = vsub.f32 %v1573, %v1574
  %v1576 = vand.u32 %v1575, 4294901760
  %1577 = vmatpush1.msra.mxu0 %v1576
  %1578 = vmatprep.subr.mxu0 0.0
  %v1579 = vand.u32 %v1359, 4294901760
  %v1580 = vsub.f32 %v1359, %v1579
  %v1581 = vand.u32 %v1580, 4294901760
  %v1582 = vsub.f32 %v1580, %v1581
  %v1583 = vand.u32 %v1582, 4294901760
  %1584 = vmatpush1.msra.mxu0 %v1583
  %1585 = vmatprep.subr.mxu0 0.0
  %1586 = vmatpush2.msra.mxu0 0.0
  %1587 = vmatprep.subr.mxu0 0.0
  %1588 = vmatpush2.msra.mxu0 0.0
  %1589 = vmatprep.subr.mxu0 0.0
  %1590 = vmatpush2.msra.mxu0 0.0
  %1591 = vmatprep.subr.mxu0 0.0
  %1592 = vmatpush2.msra.mxu0 0.0
  %1593 = vmatprep.subr.mxu0 0.0
  %1594 = vmatpush2.msra.mxu0 0.0
  %1595 = vmatprep.subr.mxu0 0.0
  %1596 = vmatpush2.msra.mxu0 0.0
  %1597 = vmatprep.subr.mxu0 0.0
  %1598 = vmatpush2.msra.mxu0 0.0
  %1599 = vmatprep.subr.mxu0 0.0
  %1600 = vmatpush2.msra.mxu0 0.0
  %1601 = vmatprep.subr.mxu0 0.0
  %1602 = vmatpush2.msra.mxu0 0.0
  %1603 = vmatprep.subr.mxu0 0.0
  %1604 = vmatpush2.msra.mxu0 0.0
  %1605 = vmatprep.subr.mxu0 0.0
  %1606 = vmatpush2.msra.mxu0 0.0
  %1607 = vmatprep.subr.mxu0 0.0
  %1608 = vmatpush2.msra.mxu0 0.0
  %1609 = vmatprep.subr.mxu0 0.0
  %1610 = vmatpush2.msra.mxu0 0.0
  %1611 = vmatprep.subr.mxu0 0.0
  %1612 = vmatpush2.msra.mxu0 0.0
  %1613 = vmatprep.subr.mxu0 0.0
  %1614 = vmatpush2.msra.mxu0 0.0
  %1615 = vmatprep.subr.mxu0 0.0
  %1616 = vmatpush2.msra.mxu0 0.0
  %1617 = vmatprep.mubr.f32.mxu0 0.0
  %v1618 = vand.u32 %v1358, 4294901760
  %1619 = vmatmul.mubr.f32.gmra.mxu0 %v1618
  %v1620 = vpop.f32.mrf.mxu0
  %v1621 = vadd.f32 %v1470, %v1620
  %v1622 = vpop.f32.mrf.mxu0
  %1623 = vdwg.mxu0
  %1624 = vmatprep.subr.mxu0 0.0
  %v1625 = vand.u32 %v1374, 4294901760
  %v1626 = vsub.f32 %v1374, %v1625
  %1627 = vmatpush1.msra.mxu0 %v1626
  %1628 = vmatprep.subr.mxu0 0.0
  %v1629 = vand.u32 %v1373, 4294901760
  %v1630 = vsub.f32 %v1373, %v1629
  %1631 = vmatpush1.msra.mxu0 %v1630
  %1632 = vmatprep.subr.mxu0 0.0
  %v1633 = vand.u32 %v1372, 4294901760
  %v1634 = vsub.f32 %v1372, %v1633
  %1635 = vmatpush1.msra.mxu0 %v1634
  %1636 = vmatprep.subr.mxu0 0.0
  %v1637 = vand.u32 %v1371, 4294901760
  %v1638 = vsub.f32 %v1371, %v1637
  %1639 = vmatpush1.msra.mxu0 %v1638
  %1640 = vmatprep.subr.mxu0 0.0
  %v1641 = vand.u32 %v1370, 4294901760
  %v1642 = vsub.f32 %v1370, %v1641
  %1643 = vmatpush1.msra.mxu0 %v1642
  %1644 = vmatprep.subr.mxu0 0.0
  %v1645 = vand.u32 %v1369, 4294901760
  %v1646 = vsub.f32 %v1369, %v1645
  %1647 = vmatpush1.msra.mxu0 %v1646
  %1648 = vmatprep.subr.mxu0 0.0
  %v1649 = vand.u32 %v1368, 4294901760
  %v1650 = vsub.f32 %v1368, %v1649
  %1651 = vmatpush1.msra.mxu0 %v1650
  %1652 = vmatprep.subr.mxu0 0.0
  %v1653 = vand.u32 %v1367, 4294901760
  %v1654 = vsub.f32 %v1367, %v1653
  %1655 = vmatpush1.msra.mxu0 %v1654
  %1656 = vmatprep.subr.mxu0 0.0
  %v1657 = vand.u32 %v1366, 4294901760
  %v1658 = vsub.f32 %v1366, %v1657
  %1659 = vmatpush1.msra.mxu0 %v1658
  %1660 = vmatprep.subr.mxu0 0.0
  %v1661 = vand.u32 %v1365, 4294901760
  %v1662 = vsub.f32 %v1365, %v1661
  %1663 = vmatpush1.msra.mxu0 %v1662
  %1664 = vmatprep.subr.mxu0 0.0
  %v1665 = vand.u32 %v1364, 4294901760
  %v1666 = vsub.f32 %v1364, %v1665
  %1667 = vmatpush1.msra.mxu0 %v1666
  %1668 = vmatprep.subr.mxu0 0.0
  %v1669 = vand.u32 %v1363, 4294901760
  %v1670 = vsub.f32 %v1363, %v1669
  %1671 = vmatpush1.msra.mxu0 %v1670
  %1672 = vmatprep.subr.mxu0 0.0
  %v1673 = vand.u32 %v1362, 4294901760
  %v1674 = vsub.f32 %v1362, %v1673
  %1675 = vmatpush1.msra.mxu0 %v1674
  %1676 = vmatprep.subr.mxu0 0.0
  %v1677 = vand.u32 %v1361, 4294901760
  %v1678 = vsub.f32 %v1361, %v1677
  %1679 = vmatpush1.msra.mxu0 %v1678
  %1680 = vmatprep.subr.mxu0 0.0
  %v1681 = vand.u32 %v1360, 4294901760
  %v1682 = vsub.f32 %v1360, %v1681
  %1683 = vmatpush1.msra.mxu0 %v1682
  %1684 = vmatprep.subr.mxu0 0.0
  %v1685 = vand.u32 %v1359, 4294901760
  %v1686 = vsub.f32 %v1359, %v1685
  %1687 = vmatpush1.msra.mxu0 %v1686
  %1688 = vmatprep.subr.mxu0 0.0
  %1689 = vmatpush2.msra.mxu0 0.0
  %1690 = vmatprep.subr.mxu0 0.0
  %1691 = vmatpush2.msra.mxu0 0.0
  %1692 = vmatprep.subr.mxu0 0.0
  %1693 = vmatpush2.msra.mxu0 0.0
  %1694 = vmatprep.subr.mxu0 0.0
  %1695 = vmatpush2.msra.mxu0 0.0
  %1696 = vmatprep.subr.mxu0 0.0
  %1697 = vmatpush2.msra.mxu0 0.0
  %1698 = vmatprep.subr.mxu0 0.0
  %1699 = vmatpush2.msra.mxu0 0.0
  %1700 = vmatprep.subr.mxu0 0.0
  %1701 = vmatpush2.msra.mxu0 0.0
  %1702 = vmatprep.subr.mxu0 0.0
  %1703 = vmatpush2.msra.mxu0 0.0
  %1704 = vmatprep.subr.mxu0 0.0
  %1705 = vmatpush2.msra.mxu0 0.0
  %1706 = vmatprep.subr.mxu0 0.0
  %1707 = vmatpush2.msra.mxu0 0.0
  %1708 = vmatprep.subr.mxu0 0.0
  %1709 = vmatpush2.msra.mxu0 0.0
  %1710 = vmatprep.subr.mxu0 0.0
  %1711 = vmatpush2.msra.mxu0 0.0
  %1712 = vmatprep.subr.mxu0 0.0
  %1713 = vmatpush2.msra.mxu0 0.0
  %1714 = vmatprep.subr.mxu0 0.0
  %1715 = vmatpush2.msra.mxu0 0.0
  %1716 = vmatprep.subr.mxu0 0.0
  %1717 = vmatpush2.msra.mxu0 0.0
  %1718 = vmatprep.subr.mxu0 0.0
  %1719 = vmatpush2.msra.mxu0 0.0
  %1720 = vmatprep.mubr.f32.mxu0 0.0
  %v1721 = vand.u32 %v1358, 4294901760
  %v1722 = vsub.f32 %v1358, %v1721
  %1723 = vmatmul.mubr.f32.gmra.mxu0 %v1722
  %v1724 = vpop.f32.mrf.mxu0
  %v1725 = vadd.f32 %v1621, %v1724
  %v1726 = vpop.f32.mrf.mxu0
  %1727 = vdwg.mxu0
  %1728 = vmatprep.subr.mxu0 0.0
  %v1729 = vand.u32 %v1374, 4294901760
  %1730 = vmatpush1.msra.mxu0 %v1729
  %1731 = vmatprep.subr.mxu0 0.0
  %v1732 = vand.u32 %v1373, 4294901760
  %1733 = vmatpush1.msra.mxu0 %v1732
  %1734 = vmatprep.subr.mxu0 0.0
  %v1735 = vand.u32 %v1372, 4294901760
  %1736 = vmatpush1.msra.mxu0 %v1735
  %1737 = vmatprep.subr.mxu0 0.0
  %v1738 = vand.u32 %v1371, 4294901760
  %1739 = vmatpush1.msra.mxu0 %v1738
  %1740 = vmatprep.subr.mxu0 0.0
  %v1741 = vand.u32 %v1370, 4294901760
  %1742 = vmatpush1.msra.mxu0 %v1741
  %1743 = vmatprep.subr.mxu0 0.0
  %v1744 = vand.u32 %v1369, 4294901760
  %1745 = vmatpush1.msra.mxu0 %v1744
  %1746 = vmatprep.subr.mxu0 0.0
  %v1747 = vand.u32 %v1368, 4294901760
  %1748 = vmatpush1.msra.mxu0 %v1747
  %1749 = vmatprep.subr.mxu0 0.0
  %v1750 = vand.u32 %v1367, 4294901760
  %1751 = vmatpush1.msra.mxu0 %v1750
  %1752 = vmatprep.subr.mxu0 0.0
  %v1753 = vand.u32 %v1366, 4294901760
  %1754 = vmatpush1.msra.mxu0 %v1753
  %1755 = vmatprep.subr.mxu0 0.0
  %v1756 = vand.u32 %v1365, 4294901760
  %1757 = vmatpush1.msra.mxu0 %v1756
  %1758 = vmatprep.subr.mxu0 0.0
  %v1759 = vand.u32 %v1364, 4294901760
  %1760 = vmatpush1.msra.mxu0 %v1759
  %1761 = vmatprep.subr.mxu0 0.0
  %v1762 = vand.u32 %v1363, 4294901760
  %1763 = vmatpush1.msra.mxu0 %v1762
  %1764 = vmatprep.subr.mxu0 0.0
  %v1765 = vand.u32 %v1362, 4294901760
  %1766 = vmatpush1.msra.mxu0 %v1765
  %1767 = vmatprep.subr.mxu0 0.0
  %v1768 = vand.u32 %v1361, 4294901760
  %1769 = vmatpush1.msra.mxu0 %v1768
  %1770 = vmatprep.subr.mxu0 0.0
  %v1771 = vand.u32 %v1360, 4294901760
  %1772 = vmatpush1.msra.mxu0 %v1771
  %1773 = vmatprep.subr.mxu0 0.0
  %v1774 = vand.u32 %v1359, 4294901760
  %1775 = vmatpush1.msra.mxu0 %v1774
  %1776 = vmatprep.subr.mxu0 0.0
  %1777 = vmatpush2.msra.mxu0 0.0
  %1778 = vmatprep.subr.mxu0 0.0
  %1779 = vmatpush2.msra.mxu0 0.0
  %1780 = vmatprep.subr.mxu0 0.0
  %1781 = vmatpush2.msra.mxu0 0.0
  %1782 = vmatprep.subr.mxu0 0.0
  %1783 = vmatpush2.msra.mxu0 0.0
  %1784 = vmatprep.subr.mxu0 0.0
  %1785 = vmatpush2.msra.mxu0 0.0
  %1786 = vmatprep.subr.mxu0 0.0
  %1787 = vmatpush2.msra.mxu0 0.0
  %1788 = vmatprep.subr.mxu0 0.0
  %1789 = vmatpush2.msra.mxu0 0.0
  %1790 = vmatprep.subr.mxu0 0.0
  %1791 = vmatpush2.msra.mxu0 0.0
  %1792 = vmatprep.subr.mxu0 0.0
  %1793 = vmatpush2.msra.mxu0 0.0
  %1794 = vmatprep.subr.mxu0 0.0
  %1795 = vmatpush2.msra.mxu0 0.0
  %1796 = vmatprep.subr.mxu0 0.0
  %1797 = vmatpush2.msra.mxu0 0.0
  %1798 = vmatprep.subr.mxu0 0.0
  %1799 = vmatpush2.msra.mxu0 0.0
  %1800 = vmatprep.subr.mxu0 0.0
  %1801 = vmatpush2.msra.mxu0 0.0
  %1802 = vmatprep.subr.mxu0 0.0
  %1803 = vmatpush2.msra.mxu0 0.0
  %1804 = vmatprep.subr.mxu0 0.0
  %1805 = vmatpush2.msra.mxu0 0.0
  %1806 = vmatprep.subr.mxu0 0.0
  %1807 = vmatpush2.msra.mxu0 0.0
  %1808 = vmatprep.mubr.f32.mxu0 0.0
  %v1809 = vand.u32 %v1358, 4294901760
  %v1810 = vsub.f32 %v1358, %v1809
  %v1811 = vand.u32 %v1810, 4294901760
  %1812 = vmatmul.mubr.f32.gmra.mxu0 %v1811
  %v1813 = vpop.f32.mrf.mxu0
  %v1814 = vadd.f32 %v1725, %v1813
  %v1815 = vpop.f32.mrf.mxu0
  %1816 = vdwg.mxu0
  %1817 = vmatprep.subr.mxu0 0.0
  %v1818 = vand.u32 %v1374, 4294901760
  %v1819 = vsub.f32 %v1374, %v1818
  %v1820 = vand.u32 %v1819, 4294901760
  %1821 = vmatpush1.msra.mxu0 %v1820
  %1822 = vmatprep.subr.mxu0 0.0
  %v1823 = vand.u32 %v1373, 4294901760
  %v1824 = vsub.f32 %v1373, %v1823
  %v1825 = vand.u32 %v1824, 4294901760
  %1826 = vmatpush1.msra.mxu0 %v1825
  %1827 = vmatprep.subr.mxu0 0.0
  %v1828 = vand.u32 %v1372, 4294901760
  %v1829 = vsub.f32 %v1372, %v1828
  %v1830 = vand.u32 %v1829, 4294901760
  %1831 = vmatpush1.msra.mxu0 %v1830
  %1832 = vmatprep.subr.mxu0 0.0
  %v1833 = vand.u32 %v1371, 4294901760
  %v1834 = vsub.f32 %v1371, %v1833
  %v1835 = vand.u32 %v1834, 4294901760
  %1836 = vmatpush1.msra.mxu0 %v1835
  %1837 = vmatprep.subr.mxu0 0.0
  %v1838 = vand.u32 %v1370, 4294901760
  %v1839 = vsub.f32 %v1370, %v1838
  %v1840 = vand.u32 %v1839, 4294901760
  %1841 = vmatpush1.msra.mxu0 %v1840
  %1842 = vmatprep.subr.mxu0 0.0
  %v1843 = vand.u32 %v1369, 4294901760
  %v1844 = vsub.f32 %v1369, %v1843
  %v1845 = vand.u32 %v1844, 4294901760
  %1846 = vmatpush1.msra.mxu0 %v1845
  %1847 = vmatprep.subr.mxu0 0.0
  %v1848 = vand.u32 %v1368, 4294901760
  %v1849 = vsub.f32 %v1368, %v1848
  %v1850 = vand.u32 %v1849, 4294901760
  %1851 = vmatpush1.msra.mxu0 %v1850
  %1852 = vmatprep.subr.mxu0 0.0
  %v1853 = vand.u32 %v1367, 4294901760
  %v1854 = vsub.f32 %v1367, %v1853
  %v1855 = vand.u32 %v1854, 4294901760
  %1856 = vmatpush1.msra.mxu0 %v1855
  %1857 = vmatprep.subr.mxu0 0.0
  %v1858 = vand.u32 %v1366, 4294901760
  %v1859 = vsub.f32 %v1366, %v1858
  %v1860 = vand.u32 %v1859, 4294901760
  %1861 = vmatpush1.msra.mxu0 %v1860
  %1862 = vmatprep.subr.mxu0 0.0
  %v1863 = vand.u32 %v1365, 4294901760
  %v1864 = vsub.f32 %v1365, %v1863
  %v1865 = vand.u32 %v1864, 4294901760
  %1866 = vmatpush1.msra.mxu0 %v1865
  %1867 = vmatprep.subr.mxu0 0.0
  %v1868 = vand.u32 %v1364, 4294901760
  %v1869 = vsub.f32 %v1364, %v1868
  %v1870 = vand.u32 %v1869, 4294901760
  %1871 = vmatpush1.msra.mxu0 %v1870
  %1872 = vmatprep.subr.mxu0 0.0
  %v1873 = vand.u32 %v1363, 4294901760
  %v1874 = vsub.f32 %v1363, %v1873
  %v1875 = vand.u32 %v1874, 4294901760
  %1876 = vmatpush1.msra.mxu0 %v1875
  %1877 = vmatprep.subr.mxu0 0.0
  %v1878 = vand.u32 %v1362, 4294901760
  %v1879 = vsub.f32 %v1362, %v1878
  %v1880 = vand.u32 %v1879, 4294901760
  %1881 = vmatpush1.msra.mxu0 %v1880
  %1882 = vmatprep.subr.mxu0 0.0
  %v1883 = vand.u32 %v1361, 4294901760
  %v1884 = vsub.f32 %v1361, %v1883
  %v1885 = vand.u32 %v1884, 4294901760
  %1886 = vmatpush1.msra.mxu0 %v1885
  %1887 = vmatprep.subr.mxu0 0.0
  %v1888 = vand.u32 %v1360, 4294901760
  %v1889 = vsub.f32 %v1360, %v1888
  %v1890 = vand.u32 %v1889, 4294901760
  %1891 = vmatpush1.msra.mxu0 %v1890
  %1892 = vmatprep.subr.mxu0 0.0
  %v1893 = vand.u32 %v1359, 4294901760
  %v1894 = vsub.f32 %v1359, %v1893
  %v1895 = vand.u32 %v1894, 4294901760
  %1896 = vmatpush1.msra.mxu0 %v1895
  %1897 = vmatprep.subr.mxu0 0.0
  %1898 = vmatpush2.msra.mxu0 0.0
  %1899 = vmatprep.subr.mxu0 0.0
  %1900 = vmatpush2.msra.mxu0 0.0
  %1901 = vmatprep.subr.mxu0 0.0
  %1902 = vmatpush2.msra.mxu0 0.0
  %1903 = vmatprep.subr.mxu0 0.0
  %1904 = vmatpush2.msra.mxu0 0.0
  %1905 = vmatprep.subr.mxu0 0.0
  %1906 = vmatpush2.msra.mxu0 0.0
  %1907 = vmatprep.subr.mxu0 0.0
  %1908 = vmatpush2.msra.mxu0 0.0
  %1909 = vmatprep.subr.mxu0 0.0
  %1910 = vmatpush2.msra.mxu0 0.0
  %1911 = vmatprep.subr.mxu0 0.0
  %1912 = vmatpush2.msra.mxu0 0.0
  %1913 = vmatprep.subr.mxu0 0.0
  %1914 = vmatpush2.msra.mxu0 0.0
  %1915 = vmatprep.subr.mxu0 0.0
  %1916 = vmatpush2.msra.mxu0 0.0
  %1917 = vmatprep.subr.mxu0 0.0
  %1918 = vmatpush2.msra.mxu0 0.0
  %1919 = vmatprep.subr.mxu0 0.0
  %1920 = vmatpush2.msra.mxu0 0.0
  %1921 = vmatprep.subr.mxu0 0.0
  %1922 = vmatpush2.msra.mxu0 0.0
  %1923 = vmatprep.subr.mxu0 0.0
  %1924 = vmatpush2.msra.mxu0 0.0
  %1925 = vmatprep.subr.mxu0 0.0
  %1926 = vmatpush2.msra.mxu0 0.0
  %1927 = vmatprep.subr.mxu0 0.0
  %1928 = vmatpush2.msra.mxu0 0.0
  %1929 = vmatprep.mubr.f32.mxu0 0.0
  %v1930 = vand.u32 %v1358, 4294901760
  %1931 = vmatmul.mubr.f32.gmra.mxu0 %v1930
  %v1932 = vpop.f32.mrf.mxu0
  %v1933 = vadd.f32 %v1814, %v1932
  %v1934 = vpop.f32.mrf.mxu0
  %1935 = vdwg.mxu0
  %1936 = vmatprep.subr.mxu0 0.0
  %v1937 = vand.u32 %v1374, 4294901760
  %1938 = vmatpush1.msra.mxu0 %v1937
  %1939 = vmatprep.subr.mxu0 0.0
  %v1940 = vand.u32 %v1373, 4294901760
  %1941 = vmatpush1.msra.mxu0 %v1940
  %1942 = vmatprep.subr.mxu0 0.0
  %v1943 = vand.u32 %v1372, 4294901760
  %1944 = vmatpush1.msra.mxu0 %v1943
  %1945 = vmatprep.subr.mxu0 0.0
  %v1946 = vand.u32 %v1371, 4294901760
  %1947 = vmatpush1.msra.mxu0 %v1946
  %1948 = vmatprep.subr.mxu0 0.0
  %v1949 = vand.u32 %v1370, 4294901760
  %1950 = vmatpush1.msra.mxu0 %v1949
  %1951 = vmatprep.subr.mxu0 0.0
  %v1952 = vand.u32 %v1369, 4294901760
  %1953 = vmatpush1.msra.mxu0 %v1952
  %1954 = vmatprep.subr.mxu0 0.0
  %v1955 = vand.u32 %v1368, 4294901760
  %1956 = vmatpush1.msra.mxu0 %v1955
  %1957 = vmatprep.subr.mxu0 0.0
  %v1958 = vand.u32 %v1367, 4294901760
  %1959 = vmatpush1.msra.mxu0 %v1958
  %1960 = vmatprep.subr.mxu0 0.0
  %v1961 = vand.u32 %v1366, 4294901760
  %1962 = vmatpush1.msra.mxu0 %v1961
  %1963 = vmatprep.subr.mxu0 0.0
  %v1964 = vand.u32 %v1365, 4294901760
  %1965 = vmatpush1.msra.mxu0 %v1964
  %1966 = vmatprep.subr.mxu0 0.0
  %v1967 = vand.u32 %v1364, 4294901760
  %1968 = vmatpush1.msra.mxu0 %v1967
  %1969 = vmatprep.subr.mxu0 0.0
  %v1970 = vand.u32 %v1363, 4294901760
  %1971 = vmatpush1.msra.mxu0 %v1970
  %1972 = vmatprep.subr.mxu0 0.0
  %v1973 = vand.u32 %v1362, 4294901760
  %1974 = vmatpush1.msra.mxu0 %v1973
  %1975 = vmatprep.subr.mxu0 0.0
  %v1976 = vand.u32 %v1361, 4294901760
  %1977 = vmatpush1.msra.mxu0 %v1976
  %1978 = vmatprep.subr.mxu0 0.0
  %v1979 = vand.u32 %v1360, 4294901760
  %1980 = vmatpush1.msra.mxu0 %v1979
  %1981 = vmatprep.subr.mxu0 0.0
  %v1982 = vand.u32 %v1359, 4294901760
  %1983 = vmatpush1.msra.mxu0 %v1982
  %1984 = vmatprep.subr.mxu0 0.0
  %1985 = vmatpush2.msra.mxu0 0.0
  %1986 = vmatprep.subr.mxu0 0.0
  %1987 = vmatpush2.msra.mxu0 0.0
  %1988 = vmatprep.subr.mxu0 0.0
  %1989 = vmatpush2.msra.mxu0 0.0
  %1990 = vmatprep.subr.mxu0 0.0
  %1991 = vmatpush2.msra.mxu0 0.0
  %1992 = vmatprep.subr.mxu0 0.0
  %1993 = vmatpush2.msra.mxu0 0.0
  %1994 = vmatprep.subr.mxu0 0.0
  %1995 = vmatpush2.msra.mxu0 0.0
  %1996 = vmatprep.subr.mxu0 0.0
  %1997 = vmatpush2.msra.mxu0 0.0
  %1998 = vmatprep.subr.mxu0 0.0
  %1999 = vmatpush2.msra.mxu0 0.0
  %2000 = vmatprep.subr.mxu0 0.0
  %2001 = vmatpush2.msra.mxu0 0.0
  %2002 = vmatprep.subr.mxu0 0.0
  %2003 = vmatpush2.msra.mxu0 0.0
  %2004 = vmatprep.subr.mxu0 0.0
  %2005 = vmatpush2.msra.mxu0 0.0
  %2006 = vmatprep.subr.mxu0 0.0
  %2007 = vmatpush2.msra.mxu0 0.0
  %2008 = vmatprep.subr.mxu0 0.0
  %2009 = vmatpush2.msra.mxu0 0.0
  %2010 = vmatprep.subr.mxu0 0.0
  %2011 = vmatpush2.msra.mxu0 0.0
  %2012 = vmatprep.subr.mxu0 0.0
  %2013 = vmatpush2.msra.mxu0 0.0
  %2014 = vmatprep.subr.mxu0 0.0
  %2015 = vmatpush2.msra.mxu0 0.0
  %2016 = vmatprep.mubr.f32.mxu0 0.0
  %v2017 = vand.u32 %v1358, 4294901760
  %2018 = vmatmul.mubr.f32.gmra.mxu0 %v2017
  %v2019 = vpop.f32.mrf.mxu0
  %v2020 = vadd.f32 %v1933, %v2019
  %v2021 = vpop.f32.mrf.mxu0
  %2022 = vdwg.mxu0
  %vm2023 = vcmask 25600
  %2024 = vst.msk [vmem:[%s7] sm:$0x3] %vm2023, %v2020
  // Predicated region
  $region30: #{unconstrained_net_forward.1} parent=0 // pred_check
    _
  $region31: #{unconstrained_net_forward.1} parent=0 // pred_check_branch
    %2026 = sbr.rel (0) target = $region33
  $region32: #{unconstrained_net_forward.1} parent=0 // pred_region
    _
  $region33: #{unconstrained_net_forward.1} parent=0 // pred_fallthru
    _
  // Predicated region
  $region34: #{unconstrained_net_forward.1} parent=0 // pred_check
    _
  $region35: #{unconstrained_net_forward.1} parent=0 // pred_check_branch
    %2028 = sbr.rel (0) target = $region37
  $region36: #{unconstrained_net_forward.1} parent=0 // pred_region
    _
  $region37: #{unconstrained_net_forward.1} parent=0 // pred_fallthru
    _

</llo_original>
